<compile_context>
chip_gen: v7x
topology: tpu7x:2x2x1
jax: 0.10.0
libtpu: 0.0.40
codegen_flags: <defaults>
</compile_context>

<pallas_src>
import functools

import jax
import jax.numpy as jnp
from jax.experimental import pallas as pl
from jax.experimental.pallas import tpu as pltpu


def _round_up(n, m):
    return ((n + m - 1) // m) * m


def _pick_tile(dim, max_tile, quantum):
    """Largest multiple of `quantum` that divides `dim` and is <= max_tile."""
    best = quantum
    t = quantum
    limit = min(max_tile, dim)
    while t <= limit:
        if dim % t == 0:
            best = t
        t += quantum
    return best


@functools.lru_cache(maxsize=None)
def _hw_config():
    """Returns (tk_max, vmem_limit_bytes); conservative (v7x-safe) fallback."""
    try:
        cap = pltpu.get_tpu_info().vmem_capacity_bytes
    except Exception:
        cap = 64 * 1024 * 1024
    if cap >= 100 * 1024 * 1024:            # v5e / v6e: 128 MiB VMEM
        return 3584, 96 * 1024 * 1024
    return 2048, 48 * 1024 * 1024           # v7x: 64 MiB VMEM per TensorCore


# ---------------------------------------------------------------------------
# Generic tiled linear (+ optional fused ReLU).
# ---------------------------------------------------------------------------
def _linear_kernel(x_ref, w_ref, b_ref, o_ref, acc_ref, *, apply_relu):
    """One (tb, tn) output tile, accumulated over the K grid axis (last)."""
    k = pl.program_id(2)

    @pl.when(k == 0)
    def _():
        acc_ref[...] = jnp.zeros_like(acc_ref)

    acc_ref[...] += jnp.dot(x_ref[...], w_ref[...],
                            preferred_element_type=jnp.float32)

    @pl.when(k == pl.num_programs(2) - 1)
    def _():
        z = acc_ref[...] + b_ref[...]          # bias / ReLU stay in f32
        if apply_relu:
            z = jnp.maximum(z, 0.0)
        o_ref[...] = z.astype(o_ref.dtype)


def pallas_linear_padded(x_p, w_p, b_p, *, relu, out_dtype,
                         tb_max=256, tn_max=2048):
    """y = x @ w + b (optional ReLU). All operands pre-padded, x/w bf16, b f32.

    x_p: (Bp, Kp) bf16, w_p: (Kp, Np) bf16, b_p: (1, Np) f32.
    Returns the padded (Bp, Np) result in `out_dtype`.
    """
    Bp, Kp = x_p.shape
    Kw, Np = w_p.shape
    assert Kp == Kw and b_p.shape == (1, Np)

    tk_max, vmem_limit = _hw_config()
    tb = _pick_tile(Bp, tb_max, 16)
    tn = _pick_tile(Np, tn_max, 128)
    tk = _pick_tile(Kp, tk_max, 128)
    grid = (Bp // tb, Np // tn, Kp // tk)

    return pl.pallas_call(
        functools.partial(_linear_kernel, apply_relu=relu),
        out_shape=jax.ShapeDtypeStruct((Bp, Np), out_dtype),
        grid_spec=pltpu.PrefetchScalarGridSpec(
            num_scalar_prefetch=0,
            grid=grid,
            in_specs=[
                pl.BlockSpec((tb, tk), lambda i, j, k: (i, k)),
                pl.BlockSpec((tk, tn), lambda i, j, k: (k, j)),
                pl.BlockSpec((1, tn), lambda i, j, k: (0, j)),
            ],
            out_specs=pl.BlockSpec((tb, tn), lambda i, j, k: (i, j)),
            scratch_shapes=[pltpu.VMEM((tb, tn), jnp.float32)],
        ),
        compiler_params=pltpu.CompilerParams(
            dimension_semantics=("parallel", "parallel", "arbitrary"),
            vmem_limit_bytes=vmem_limit,
        ),
    )(x_p, w_p, b_p)


# ---------------------------------------------------------------------------
# Fused "wide linear -> ReLU -> tiny linear" head (one pallas_call).
#   out = ReLU(x @ w1 + b1) @ w2 + b2        (hidden never touches HBM)
# Covers:  classifier L2 (4096x4096) + cls_fc (4096x31-pad-128)
#          discriminator  (25088x100-pad-128) + (100x2-pad-128)
# ---------------------------------------------------------------------------
def _fused_head_kernel(x_ref, w1_ref, b1_ref, w2_ref, b2_ref, o_ref,
                       acc_h_ref, acc_o_ref):
    j = pl.program_id(1)
    k = pl.program_id(2)
    last_k = k == pl.num_programs(2) - 1
    last_j = j == pl.num_programs(1) - 1

    @pl.when(k == 0)
    def _():
        acc_h_ref[...] = jnp.zeros_like(acc_h_ref)

    @pl.when((j == 0) & (k == 0))
    def _():
        acc_o_ref[...] = jnp.zeros_like(acc_o_ref)

    acc_h_ref[...] += jnp.dot(x_ref[...], w1_ref[...],
                              preferred_element_type=jnp.float32)

    @pl.when(last_k)
    def _():
        h = jnp.maximum(acc_h_ref[...] + b1_ref[...], 0.0)
        acc_o_ref[...] += jnp.dot(h.astype(w2_ref.dtype), w2_ref[...],
                                  preferred_element_type=jnp.float32)

    @pl.when(last_k & last_j)
    def _():
        o_ref[...] = (acc_o_ref[...] + b2_ref[...]).astype(o_ref.dtype)


def pallas_fused_mlp_head(x_p, w1_p, b1_p, w2_p, b2_p, *,
                          tb_max=256, tn_max=2048):
    """ReLU(x @ w1 + b1) @ w2 + b2 with all operands pre-padded (x/w bf16, b f32)."""
    Bp, Kp = x_p.shape
    Kw, Np = w1_p.shape
    Nw, No = w2_p.shape
    assert Kp == Kw and Np == Nw
    assert b1_p.shape == (1, Np) and b2_p.shape == (1, No)

    tk_max, vmem_limit = _hw_config()
    tb = _pick_tile(Bp, tb_max, 16)
    tn = _pick_tile(Np, tn_max, 128)
    tk = _pick_tile(Kp, tk_max, 128)
    grid = (Bp // tb, Np // tn, Kp // tk)

    return pl.pallas_call(
        _fused_head_kernel,
        out_shape=jax.ShapeDtypeStruct((Bp, No), jnp.float32),
        grid_spec=pltpu.PrefetchScalarGridSpec(
            num_scalar_prefetch=0,
            grid=grid,
            in_specs=[
                pl.BlockSpec((tb, tk), lambda i, j, k: (i, k)),
                pl.BlockSpec((tk, tn), lambda i, j, k: (k, j)),
                pl.BlockSpec((1, tn), lambda i, j, k: (0, j)),
                pl.BlockSpec((tn, No), lambda i, j, k: (j, 0)),
                pl.BlockSpec((1, No), lambda i, j, k: (0, 0)),
            ],
            out_specs=pl.BlockSpec((tb, No), lambda i, j, k: (i, 0)),
            scratch_shapes=[pltpu.VMEM((tb, tn), jnp.float32),
                            pltpu.VMEM((tb, No), jnp.float32)],
        ),
        compiler_params=pltpu.CompilerParams(
            # j is a reduction axis for the fused small head -> must be arbitrary.
            dimension_semantics=("parallel", "arbitrary", "arbitrary"),
            vmem_limit_bytes=vmem_limit,
        ),
    )(x_p, w1_p, b1_p, w2_p, b2_p)


# ---------------------------------------------------------------------------
# Parameters.
# ---------------------------------------------------------------------------
_LAYERS = ("c1", "c2", "cls", "d1", "d2")


def init_params(key, d_feat, d_hidden, n_classes, d_disc_hidden, d_disc_out):
    """Deterministic synthetic f32 parameters matching the module's layer shapes."""
    ks = jax.random.split(key, 10)

    def linear(kw, kb, d_in, d_out):
        w = jax.random.normal(kw, (d_in, d_out), jnp.float32) / jnp.sqrt(d_in)
        b = jax.random.normal(kb, (1, d_out), jnp.float32) * 0.01
        return w, b

    dims = {"c1": (d_feat, d_hidden), "c2": (d_hidden, d_hidden),
            "cls": (d_hidden, n_classes),
            "d1": (d_feat, d_disc_hidden), "d2": (d_disc_hidden, d_disc_out)}
    params = {}
    for i, name in enumerate(_LAYERS):
        w, b = linear(ks[2 * i], ks[2 * i + 1], *dims[name])
        params[f"w_{name}"] = w
        params[f"b_{name}"] = b
    return params


def prepare_params(raw):
    """One-time prep: bf16 weights / f32 biases, zero-padded to 128-lane multiples."""
    prepared = {}
    for name in _LAYERS:
        w = raw[f"w_{name}"]
        b = raw[f"b_{name}"].reshape(1, -1)
        K, N = w.shape
        Kp, Np = _round_up(K, 128), _round_up(N, 128)
        prepared[f"w_{name}"] = jnp.pad(w.astype(jnp.bfloat16),
                                        ((0, Kp - K), (0, Np - N)))
        prepared[f"b_{name}"] = jnp.pad(b.astype(jnp.float32),
                                        ((0, 0), (0, Np - N)))
    return prepared


# ---------------------------------------------------------------------------
# Forward of everything after the VGG16 conv backbone.
# ---------------------------------------------------------------------------
def dann_grl_vgg16_head(feat, delta, prepared, *, n_classes=31, d_disc_out=2):
    """feat: (B, D_feat) flattened backbone features. Returns (class_pred, loss_adv)."""
    del delta  # ReverseLayerGrad is the identity in the forward pass.
    # TODO(synk): VGG16 pretrained conv backbone (model.features) needs external
    # torchvision weights; this kernel stack consumes the flattened features.
    # TODO(synk): nn.Dropout layers are treated as identity (eval semantics);
    # training-mode dropout would require pltpu.prng_* masks.
    # TODO(synk): ReverseLayerGrad has no custom VJP here (forward identity only).

    B, K = feat.shape
    Bp, Kp = _round_up(B, 16), _round_up(K, 128)
    # Cast / pad the features ONCE; shared by classifier-L1 and discriminator.
    feat_p = jnp.pad(feat.astype(jnp.bfloat16), ((0, Bp - B), (0, Kp - K)))

    # classifier layer 1: 25088 -> 4096, ReLU (bf16, stays padded in HBM)
    h1 = pallas_linear_padded(feat_p, prepared["w_c1"], prepared["b_c1"],
                              relu=True, out_dtype=jnp.bfloat16)
    # classifier layer 2 + cls_fc fused: 4096 -> 4096 -> ReLU -> 31
    class_pred = pallas_fused_mlp_head(h1, prepared["w_c2"], prepared["b_c2"],
                                       prepared["w_cls"], prepared["b_cls"])
    # discriminator fused (on gradient-reversed feat): 25088 -> 100 -> ReLU -> 2
    loss_adv = pallas_fused_mlp_head(feat_p, prepared["w_d1"], prepared["b_d1"],
                                     prepared["w_d2"], prepared["b_d2"])
    return class_pred[:B, :n_classes], loss_adv[:B, :d_disc_out]


# ---------------------------------------------------------------------------
# Pure-JAX reference (same bf16 matmul-operand casts, f32 accumulate).
# ---------------------------------------------------------------------------
def reference_forward(feat, raw):
    def lin(x, w, b, relu):
        z = jnp.dot(x.astype(jnp.bfloat16), w.astype(jnp.bfloat16),
                    preferred_element_type=jnp.float32) + b
        return jnp.maximum(z, 0.0) if relu else z

    h = lin(feat, raw["w_c1"], raw["b_c1"], True).astype(jnp.bfloat16)
    h = lin(h, raw["w_c2"], raw["b_c2"], True).astype(jnp.bfloat16)
    class_pred = lin(h, raw["w_cls"], raw["b_cls"], False)
    d = lin(feat, raw["w_d1"], raw["b_d1"], True).astype(jnp.bfloat16)
    loss_adv = lin(d, raw["w_d2"], raw["b_d2"], False)
    return class_pred, loss_adv


if __name__ == "__main__":
    # Real module dims: D_feat=25088, hidden=4096, 31 classes, disc 100 -> 2.
    # Scaled-down but shape-consistent sizes for a quick self-test.
    B, D_FEAT, H = 16, 512, 256
    N_CLS, D_DHID, D_DOUT = 31, 100, 2

    key = jax.random.PRNGKey(0)
    k_feat, k_params = jax.random.split(key)
    feat = jax.random.normal(k_feat, (B, D_FEAT), jnp.float32)
    delta = 1.0  # GRL coefficient (backward-only)

    raw_params = init_params(k_params, D_FEAT, H, N_CLS, D_DHID, D_DOUT)
    prepared = prepare_params(raw_params)      # one-time bf16 cast + 128-pad

    fwd = jax.jit(
        lambda f, d: dann_grl_vgg16_head(f, d, prepared,
                                         n_classes=N_CLS, d_disc_out=D_DOUT))
    class_pred, loss_adv = jax.block_until_ready(fwd(feat, delta))

    ref_cls, ref_adv = reference_forward(feat, raw_params)
    assert class_pred.shape == (B, N_CLS)
    assert loss_adv.shape == (B, D_DOUT)
    # bf16 matmul operands -> relaxed tolerance vs the f32-accumulated reference.
    assert jnp.allclose(class_pred, ref_cls, atol=2e-2, rtol=2e-2), "class_pred mismatch"
    assert jnp.allclose(loss_adv, ref_adv, atol=2e-2, rtol=2e-2), "loss_adv mismatch"

    print("KERNEL_OK")
</pallas_src>

<mosaic_0001>
module attributes {stable_mosaic.version = 11 : i64} {
  func.func @_linear_kernel(%arg0: i32, %arg1: i32, %arg2: i32, %arg3: memref<16x512xbf16, #tpu.memory_space<vmem>>, %arg4: memref<512x256xbf16, #tpu.memory_space<vmem>>, %arg5: memref<1x256xf32, #tpu.memory_space<vmem>>, %arg6: memref<16x256xbf16, #tpu.memory_space<vmem>>, %arg7: memref<16x256xf32, #tpu.memory_space<vmem>>) attributes {dimension_semantics = [#tpu.dimension_semantics<parallel>, #tpu.dimension_semantics<parallel>, #tpu.dimension_semantics<arbitrary>], iteration_bounds = array<i64: 1, 1, 1>, scalar_prefetch = 0 : i64, scratch_operands = 1 : i64, tpu.core_type = #tpu.core_type<tc>, window_params = [{transform_indices = @transform_0, window_bounds = array<i64: 16, 512>}, {transform_indices = @transform_1, window_bounds = array<i64: 512, 256>}, {transform_indices = @transform_2, window_bounds = array<i64: 1, 256>}, {transform_indices = @transform_3, window_bounds = array<i64: 16, 256>}]} {
    %c0_i32 = arith.constant 0 : i32
    %0 = arith.cmpi eq, %arg2, %c0_i32 : i32
    %1 = arith.extui %0 : i1 to i32
    %c0_i32_0 = arith.constant 0 : i32
    %2 = arith.cmpi ne, %1, %c0_i32_0 : i32
    scf.if %2 {
      %cst_10 = arith.constant 0.000000e+00 : f32
      %12 = vector.broadcast %cst_10 : f32 to vector<16x256xf32>
      %c0_11 = arith.constant 0 : index
      %c0_12 = arith.constant 0 : index
      %13 = vector.load %arg7[%c0_11, %c0_12] : memref<16x256xf32, #tpu.memory_space<vmem>>, vector<16x256xf32>
      tpu.vector_store %arg7[%c0_11, %c0_12], %12 {strides = array<i32>} : memref<16x256xf32, #tpu.memory_space<vmem>>, vector<16x256xf32>,
    } else {
    }
    %c0 = arith.constant 0 : index
    %c0_1 = arith.constant 0 : index
    %3 = vector.load %arg7[%c0, %c0_1] : memref<16x256xf32, #tpu.memory_space<vmem>>, vector<16x256xf32>
    %c0_2 = arith.constant 0 : index
    %c0_3 = arith.constant 0 : index
    %4 = vector.load %arg3[%c0_2, %c0_3] : memref<16x512xbf16, #tpu.memory_space<vmem>>, vector<16x512xbf16>
    %c0_4 = arith.constant 0 : index
    %c0_5 = arith.constant 0 : index
    %5 = vector.load %arg4[%c0_4, %c0_5] : memref<512x256xbf16, #tpu.memory_space<vmem>>, vector<512x256xbf16>
    %cst = arith.constant dense<0.000000e+00> : vector<16x256xf32>
    %6 = tpu.matmul %4, %5, %cst {dimension_numbers = #tpu.dot_dimension_numbers<[1], [0], [0], [1], [0, 0, 1, 1], [], []>} : vector<16x512xbf16>, vector<512x256xbf16>, vector<16x256xf32> -> vector<16x256xf32>
    %7 = arith.addf %3, %6 : vector<16x256xf32>
    %c0_6 = arith.constant 0 : index
    %c0_7 = arith.constant 0 : index
    %8 = vector.load %arg7[%c0_6, %c0_7] : memref<16x256xf32, #tpu.memory_space<vmem>>, vector<16x256xf32>
    tpu.vector_store %arg7[%c0_6, %c0_7], %7 {strides = array<i32>} : memref<16x256xf32, #tpu.memory_space<vmem>>, vector<16x256xf32>,
    %c0_i32_8 = arith.constant 0 : i32
    %9 = arith.cmpi eq, %arg2, %c0_i32_8 : i32
    %10 = arith.extui %9 : i1 to i32
    %c0_i32_9 = arith.constant 0 : i32
    %11 = arith.cmpi ne, %10, %c0_i32_9 : i32
    scf.if %11 {
      %c0_10 = arith.constant 0 : index
      %c0_11 = arith.constant 0 : index
      %12 = vector.load %arg7[%c0_10, %c0_11] : memref<16x256xf32, #tpu.memory_space<vmem>>, vector<16x256xf32>
      %c0_12 = arith.constant 0 : index
      %c0_13 = arith.constant 0 : index
      %13 = vector.load %arg5[%c0_12, %c0_13] : memref<1x256xf32, #tpu.memory_space<vmem>>, vector<1x256xf32>
      %14 = vector.broadcast %13 : vector<1x256xf32> to vector<16x256xf32>
      %15 = arith.addf %12, %14 : vector<16x256xf32>
      %cst_14 = arith.constant 0.000000e+00 : f32
      %16 = vector.broadcast %cst_14 : f32 to vector<16x256xf32>
      %17 = arith.maximumf %15, %16 : vector<16x256xf32>
      %18 = arith.truncf %17 : vector<16x256xf32> to vector<16x256xbf16>
      %c0_15 = arith.constant 0 : index
      %c0_16 = arith.constant 0 : index
      %19 = vector.load %arg6[%c0_15, %c0_16] : memref<16x256xbf16, #tpu.memory_space<vmem>>, vector<16x256xbf16>
      tpu.vector_store %arg6[%c0_15, %c0_16], %18 {strides = array<i32>} : memref<16x256xbf16, #tpu.memory_space<vmem>>, vector<16x256xbf16>,
    } else {
    }
    return
  }
  func.func @transform_0(%arg0: i32, %arg1: i32, %arg2: i32) -> (i32, i32) {
    %c0_i32 = arith.constant 0 : i32
    return %arg0, %arg2 : i32, i32
  }
  func.func @transform_1(%arg0: i32, %arg1: i32, %arg2: i32) -> (i32, i32) {
    %c0_i32 = arith.constant 0 : i32
    return %arg2, %arg1 : i32, i32
  }
  func.func @transform_2(%arg0: i32, %arg1: i32, %arg2: i32) -> (i32, i32) {
    %c0_i32 = arith.constant 0 : i32
    %c0_i32_0 = arith.constant 0 : i32
    return %c0_i32, %arg1 : i32, i32
  }
  func.func @transform_3(%arg0: i32, %arg1: i32, %arg2: i32) -> (i32, i32) {
    %c0_i32 = arith.constant 0 : i32
    return %arg0, %arg1 : i32, i32
  }
}

module attributes {stable_mosaic.version = 11 : i64} {
  func.func @_fused_head_kernel(%arg0: i32, %arg1: i32, %arg2: i32, %arg3: memref<16x256xbf16, #tpu.memory_space<vmem>>, %arg4: memref<256x256xbf16, #tpu.memory_space<vmem>>, %arg5: memref<1x256xf32, #tpu.memory_space<vmem>>, %arg6: memref<256x128xbf16, #tpu.memory_space<vmem>>, %arg7: memref<1x128xf32, #tpu.memory_space<vmem>>, %arg8: memref<16x128xf32, #tpu.memory_space<vmem>>, %arg9: memref<16x256xf32, #tpu.memory_space<vmem>>, %arg10: memref<16x128xf32, #tpu.memory_space<vmem>>) attributes {dimension_semantics = [#tpu.dimension_semantics<parallel>, #tpu.dimension_semantics<arbitrary>, #tpu.dimension_semantics<arbitrary>], iteration_bounds = array<i64: 1, 1, 1>, scalar_prefetch = 0 : i64, scratch_operands = 2 : i64, tpu.core_type = #tpu.core_type<tc>, window_params = [{transform_indices = @transform_0, window_bounds = array<i64: 16, 256>}, {transform_indices = @transform_1, window_bounds = array<i64: 256, 256>}, {transform_indices = @transform_2, window_bounds = array<i64: 1, 256>}, {transform_indices = @transform_3, window_bounds = array<i64: 256, 128>}, {pipeline_mode = #tpu.pipeline_mode<synchronous>, transform_indices = @transform_4, window_bounds = array<i64: 1, 128>}, {transform_indices = @transform_5, window_bounds = array<i64: 16, 128>}]} {
    %c0_i32 = arith.constant 0 : i32
    %0 = arith.cmpi eq, %arg2, %c0_i32 : i32
    %c0_i32_0 = arith.constant 0 : i32
    %1 = arith.cmpi eq, %arg1, %c0_i32_0 : i32
    %c0_i32_1 = arith.constant 0 : i32
    %2 = arith.cmpi eq, %arg2, %c0_i32_1 : i32
    %3 = arith.extui %2 : i1 to i32
    %c0_i32_2 = arith.constant 0 : i32
    %4 = arith.cmpi ne, %3, %c0_i32_2 : i32
    scf.if %4 {
      %cst_15 = arith.constant 0.000000e+00 : f32
      %21 = vector.broadcast %cst_15 : f32 to vector<16x256xf32>
      %c0_16 = arith.constant 0 : index
      %c0_17 = arith.constant 0 : index
      %22 = vector.load %arg9[%c0_16, %c0_17] : memref<16x256xf32, #tpu.memory_space<vmem>>, vector<16x256xf32>
      tpu.vector_store %arg9[%c0_16, %c0_17], %21 {strides = array<i32>} : memref<16x256xf32, #tpu.memory_space<vmem>>, vector<16x256xf32>,
    } else {
    }
    %c0_i32_3 = arith.constant 0 : i32
    %5 = arith.cmpi eq, %arg1, %c0_i32_3 : i32
    %c0_i32_4 = arith.constant 0 : i32
    %6 = arith.cmpi eq, %arg2, %c0_i32_4 : i32
    %7 = arith.andi %5, %6 : i1
    %8 = arith.extui %7 : i1 to i32
    %c0_i32_5 = arith.constant 0 : i32
    %9 = arith.cmpi ne, %8, %c0_i32_5 : i32
    scf.if %9 {
      %cst_15 = arith.constant 0.000000e+00 : f32
      %21 = vector.broadcast %cst_15 : f32 to vector<16x128xf32>
      %c0_16 = arith.constant 0 : index
      %c0_17 = arith.constant 0 : index
      %22 = vector.load %arg10[%c0_16, %c0_17] : memref<16x128xf32, #tpu.memory_space<vmem>>, vector<16x128xf32>
      tpu.vector_store %arg10[%c0_16, %c0_17], %21 {strides = array<i32>} : memref<16x128xf32, #tpu.memory_space<vmem>>, vector<16x128xf32>,
    } else {
    }
    %c0 = arith.constant 0 : index
    %c0_6 = arith.constant 0 : index
    %10 = vector.load %arg9[%c0, %c0_6] : memref<16x256xf32, #tpu.memory_space<vmem>>, vector<16x256xf32>
    %c0_7 = arith.constant 0 : index
    %c0_8 = arith.constant 0 : index
    %11 = vector.load %arg3[%c0_7, %c0_8] : memref<16x256xbf16, #tpu.memory_space<vmem>>, vector<16x256xbf16>
    %c0_9 = arith.constant 0 : index
    %c0_10 = arith.constant 0 : index
    %12 = vector.load %arg4[%c0_9, %c0_10] : memref<256x256xbf16, #tpu.memory_space<vmem>>, vector<256x256xbf16>
    %cst = arith.constant dense<0.000000e+00> : vector<16x256xf32>
    %13 = tpu.matmul %11, %12, %cst {dimension_numbers = #tpu.dot_dimension_numbers<[1], [0], [0], [1], [0, 0, 1, 1], [], []>} : vector<16x256xbf16>, vector<256x256xbf16>, vector<16x256xf32> -> vector<16x256xf32>
    %14 = arith.addf %10, %13 : vector<16x256xf32>
    %c0_11 = arith.constant 0 : index
    %c0_12 = arith.constant 0 : index
    %15 = vector.load %arg9[%c0_11, %c0_12] : memref<16x256xf32, #tpu.memory_space<vmem>>, vector<16x256xf32>
    tpu.vector_store %arg9[%c0_11, %c0_12], %14 {strides = array<i32>} : memref<16x256xf32, #tpu.memory_space<vmem>>, vector<16x256xf32>,
    %16 = arith.extui %0 : i1 to i32
    %c0_i32_13 = arith.constant 0 : i32
    %17 = arith.cmpi ne, %16, %c0_i32_13 : i32
    scf.if %17 {
      %c0_15 = arith.constant 0 : index
      %c0_16 = arith.constant 0 : index
      %21 = vector.load %arg9[%c0_15, %c0_16] : memref<16x256xf32, #tpu.memory_space<vmem>>, vector<16x256xf32>
      %c0_17 = arith.constant 0 : index
      %c0_18 = arith.constant 0 : index
      %22 = vector.load %arg5[%c0_17, %c0_18] : memref<1x256xf32, #tpu.memory_space<vmem>>, vector<1x256xf32>
      %23 = vector.broadcast %22 : vector<1x256xf32> to vector<16x256xf32>
      %24 = arith.addf %21, %23 : vector<16x256xf32>
      %cst_19 = arith.constant 0.000000e+00 : f32
      %25 = vector.broadcast %cst_19 : f32 to vector<16x256xf32>
      %26 = arith.maximumf %24, %25 : vector<16x256xf32>
      %c0_20 = arith.constant 0 : index
      %c0_21 = arith.constant 0 : index
      %27 = vector.load %arg10[%c0_20, %c0_21] : memref<16x128xf32, #tpu.memory_space<vmem>>, vector<16x128xf32>
      %28 = arith.truncf %26 : vector<16x256xf32> to vector<16x256xbf16>
      %c0_22 = arith.constant 0 : index
      %c0_23 = arith.constant 0 : index
      %29 = vector.load %arg6[%c0_22, %c0_23] : memref<256x128xbf16, #tpu.memory_space<vmem>>, vector<256x128xbf16>
      %cst_24 = arith.constant dense<0.000000e+00> : vector<16x128xf32>
      %30 = tpu.matmul %28, %29, %cst_24 {dimension_numbers = #tpu.dot_dimension_numbers<[1], [0], [0], [1], [0, 0, 1, 1], [], []>} : vector<16x256xbf16>, vector<256x128xbf16>, vector<16x128xf32> -> vector<16x128xf32>
      %31 = arith.addf %27, %30 : vector<16x128xf32>
      %c0_25 = arith.constant 0 : index
      %c0_26 = arith.constant 0 : index
      %32 = vector.load %arg10[%c0_25, %c0_26] : memref<16x128xf32, #tpu.memory_space<vmem>>, vector<16x128xf32>
      tpu.vector_store %arg10[%c0_25, %c0_26], %31 {strides = array<i32>} : memref<16x128xf32, #tpu.memory_space<vmem>>, vector<16x128xf32>,
    } else {
    }
    %18 = arith.andi %0, %1 : i1
    %19 = arith.extui %18 : i1 to i32
    %c0_i32_14 = arith.constant 0 : i32
    %20 = arith.cmpi ne, %19, %c0_i32_14 : i32
    scf.if %20 {
      %c0_15 = arith.constant 0 : index
      %c0_16 = arith.constant 0 : index
      %21 = vector.load %arg10[%c0_15, %c0_16] : memref<16x128xf32, #tpu.memory_space<vmem>>, vector<16x128xf32>
      %c0_17 = arith.constant 0 : index
      %c0_18 = arith.constant 0 : index
      %22 = vector.load %arg7[%c0_17, %c0_18] : memref<1x128xf32, #tpu.memory_space<vmem>>, vector<1x128xf32>
      %23 = vector.broadcast %22 : vector<1x128xf32> to vector<16x128xf32>
      %24 = arith.addf %21, %23 : vector<16x128xf32>
      %c0_19 = arith.constant 0 : index
      %c0_20 = arith.constant 0 : index
      %25 = vector.load %arg8[%c0_19, %c0_20] : memref<16x128xf32, #tpu.memory_space<vmem>>, vector<16x128xf32>
      tpu.vector_store %arg8[%c0_19, %c0_20], %24 {strides = array<i32>} : memref<16x128xf32, #tpu.memory_space<vmem>>, vector<16x128xf32>,
    } else {
    }
    return
  }
  func.func @transform_0(%arg0: i32, %arg1: i32, %arg2: i32) -> (i32, i32) {
    %c0_i32 = arith.constant 0 : i32
    return %arg0, %arg2 : i32, i32
  }
  func.func @transform_1(%arg0: i32, %arg1: i32, %arg2: i32) -> (i32, i32) {
    %c0_i32 = arith.constant 0 : i32
    return %arg2, %arg1 : i32, i32
  }
  func.func @transform_2(%arg0: i32, %arg1: i32, %arg2: i32) -> (i32, i32) {
    %c0_i32 = arith.constant 0 : i32
    %c0_i32_0 = arith.constant 0 : i32
    return %c0_i32, %arg1 : i32, i32
  }
  func.func @transform_3(%arg0: i32, %arg1: i32, %arg2: i32) -> (i32, i32) {
    %c0_i32 = arith.constant 0 : i32
    %c0_i32_0 = arith.constant 0 : i32
    return %arg1, %c0_i32 : i32, i32
  }
  func.func @transform_4(%arg0: i32, %arg1: i32, %arg2: i32) -> (i32, i32) {
    %c0_i32 = arith.constant 0 : i32
    %c0_i32_0 = arith.constant 0 : i32
    %c0_i32_1 = arith.constant 0 : i32
    return %c0_i32, %c0_i32_0 : i32, i32
  }
  func.func @transform_5(%arg0: i32, %arg1: i32, %arg2: i32) -> (i32, i32) {
    %c0_i32 = arith.constant 0 : i32
    %c0_i32_0 = arith.constant 0 : i32
    return %arg0, %c0_i32 : i32, i32
  }
}

module attributes {stable_mosaic.version = 11 : i64} {
  func.func @_fused_head_kernel(%arg0: i32, %arg1: i32, %arg2: i32, %arg3: memref<16x512xbf16, #tpu.memory_space<vmem>>, %arg4: memref<512x128xbf16, #tpu.memory_space<vmem>>, %arg5: memref<1x128xf32, #tpu.memory_space<vmem>>, %arg6: memref<128x128xbf16, #tpu.memory_space<vmem>>, %arg7: memref<1x128xf32, #tpu.memory_space<vmem>>, %arg8: memref<16x128xf32, #tpu.memory_space<vmem>>, %arg9: memref<16x128xf32, #tpu.memory_space<vmem>>, %arg10: memref<16x128xf32, #tpu.memory_space<vmem>>) attributes {dimension_semantics = [#tpu.dimension_semantics<parallel>, #tpu.dimension_semantics<arbitrary>, #tpu.dimension_semantics<arbitrary>], iteration_bounds = array<i64: 1, 1, 1>, scalar_prefetch = 0 : i64, scratch_operands = 2 : i64, tpu.core_type = #tpu.core_type<tc>, window_params = [{transform_indices = @transform_0, window_bounds = array<i64: 16, 512>}, {transform_indices = @transform_1, window_bounds = array<i64: 512, 128>}, {transform_indices = @transform_2, window_bounds = array<i64: 1, 128>}, {transform_indices = @transform_3, window_bounds = array<i64: 128, 128>}, {pipeline_mode = #tpu.pipeline_mode<synchronous>, transform_indices = @transform_4, window_bounds = array<i64: 1, 128>}, {transform_indices = @transform_5, window_bounds = array<i64: 16, 128>}]} {
    %c0_i32 = arith.constant 0 : i32
    %0 = arith.cmpi eq, %arg2, %c0_i32 : i32
    %c0_i32_0 = arith.constant 0 : i32
    %1 = arith.cmpi eq, %arg1, %c0_i32_0 : i32
    %c0_i32_1 = arith.constant 0 : i32
    %2 = arith.cmpi eq, %arg2, %c0_i32_1 : i32
    %3 = arith.extui %2 : i1 to i32
    %c0_i32_2 = arith.constant 0 : i32
    %4 = arith.cmpi ne, %3, %c0_i32_2 : i32
    scf.if %4 {
      %cst_15 = arith.constant 0.000000e+00 : f32
      %21 = vector.broadcast %cst_15 : f32 to vector<16x128xf32>
      %c0_16 = arith.constant 0 : index
      %c0_17 = arith.constant 0 : index
      %22 = vector.load %arg9[%c0_16, %c0_17] : memref<16x128xf32, #tpu.memory_space<vmem>>, vector<16x128xf32>
      tpu.vector_store %arg9[%c0_16, %c0_17], %21 {strides = array<i32>} : memref<16x128xf32, #tpu.memory_space<vmem>>, vector<16x128xf32>,
    } else {
    }
    %c0_i32_3 = arith.constant 0 : i32
    %5 = arith.cmpi eq, %arg1, %c0_i32_3 : i32
    %c0_i32_4 = arith.constant 0 : i32
    %6 = arith.cmpi eq, %arg2, %c0_i32_4 : i32
    %7 = arith.andi %5, %6 : i1
    %8 = arith.extui %7 : i1 to i32
    %c0_i32_5 = arith.constant 0 : i32
    %9 = arith.cmpi ne, %8, %c0_i32_5 : i32
    scf.if %9 {
      %cst_15 = arith.constant 0.000000e+00 : f32
      %21 = vector.broadcast %cst_15 : f32 to vector<16x128xf32>
      %c0_16 = arith.constant 0 : index
      %c0_17 = arith.constant 0 : index
      %22 = vector.load %arg10[%c0_16, %c0_17] : memref<16x128xf32, #tpu.memory_space<vmem>>, vector<16x128xf32>
      tpu.vector_store %arg10[%c0_16, %c0_17], %21 {strides = array<i32>} : memref<16x128xf32, #tpu.memory_space<vmem>>, vector<16x128xf32>,
    } else {
    }
    %c0 = arith.constant 0 : index
    %c0_6 = arith.constant 0 : index
    %10 = vector.load %arg9[%c0, %c0_6] : memref<16x128xf32, #tpu.memory_space<vmem>>, vector<16x128xf32>
    %c0_7 = arith.constant 0 : index
    %c0_8 = arith.constant 0 : index
    %11 = vector.load %arg3[%c0_7, %c0_8] : memref<16x512xbf16, #tpu.memory_space<vmem>>, vector<16x512xbf16>
    %c0_9 = arith.constant 0 : index
    %c0_10 = arith.constant 0 : index
    %12 = vector.load %arg4[%c0_9, %c0_10] : memref<512x128xbf16, #tpu.memory_space<vmem>>, vector<512x128xbf16>
    %cst = arith.constant dense<0.000000e+00> : vector<16x128xf32>
    %13 = tpu.matmul %11, %12, %cst {dimension_numbers = #tpu.dot_dimension_numbers<[1], [0], [0], [1], [0, 0, 1, 1], [], []>} : vector<16x512xbf16>, vector<512x128xbf16>, vector<16x128xf32> -> vector<16x128xf32>
    %14 = arith.addf %10, %13 : vector<16x128xf32>
    %c0_11 = arith.constant 0 : index
    %c0_12 = arith.constant 0 : index
    %15 = vector.load %arg9[%c0_11, %c0_12] : memref<16x128xf32, #tpu.memory_space<vmem>>, vector<16x128xf32>
    tpu.vector_store %arg9[%c0_11, %c0_12], %14 {strides = array<i32>} : memref<16x128xf32, #tpu.memory_space<vmem>>, vector<16x128xf32>,
    %16 = arith.extui %0 : i1 to i32
    %c0_i32_13 = arith.constant 0 : i32
    %17 = arith.cmpi ne, %16, %c0_i32_13 : i32
    scf.if %17 {
      %c0_15 = arith.constant 0 : index
      %c0_16 = arith.constant 0 : index
      %21 = vector.load %arg9[%c0_15, %c0_16] : memref<16x128xf32, #tpu.memory_space<vmem>>, vector<16x128xf32>
      %c0_17 = arith.constant 0 : index
      %c0_18 = arith.constant 0 : index
      %22 = vector.load %arg5[%c0_17, %c0_18] : memref<1x128xf32, #tpu.memory_space<vmem>>, vector<1x128xf32>
      %23 = vector.broadcast %22 : vector<1x128xf32> to vector<16x128xf32>
      %24 = arith.addf %21, %23 : vector<16x128xf32>
      %cst_19 = arith.constant 0.000000e+00 : f32
      %25 = vector.broadcast %cst_19 : f32 to vector<16x128xf32>
      %26 = arith.maximumf %24, %25 : vector<16x128xf32>
      %c0_20 = arith.constant 0 : index
      %c0_21 = arith.constant 0 : index
      %27 = vector.load %arg10[%c0_20, %c0_21] : memref<16x128xf32, #tpu.memory_space<vmem>>, vector<16x128xf32>
      %28 = arith.truncf %26 : vector<16x128xf32> to vector<16x128xbf16>
      %c0_22 = arith.constant 0 : index
      %c0_23 = arith.constant 0 : index
      %29 = vector.load %arg6[%c0_22, %c0_23] : memref<128x128xbf16, #tpu.memory_space<vmem>>, vector<128x128xbf16>
      %cst_24 = arith.constant dense<0.000000e+00> : vector<16x128xf32>
      %30 = tpu.matmul %28, %29, %cst_24 {dimension_numbers = #tpu.dot_dimension_numbers<[1], [0], [0], [1], [0, 0, 1, 1], [], []>} : vector<16x128xbf16>, vector<128x128xbf16>, vector<16x128xf32> -> vector<16x128xf32>
      %31 = arith.addf %27, %30 : vector<16x128xf32>
      %c0_25 = arith.constant 0 : index
      %c0_26 = arith.constant 0 : index
      %32 = vector.load %arg10[%c0_25, %c0_26] : memref<16x128xf32, #tpu.memory_space<vmem>>, vector<16x128xf32>
      tpu.vector_store %arg10[%c0_25, %c0_26], %31 {strides = array<i32>} : memref<16x128xf32, #tpu.memory_space<vmem>>, vector<16x128xf32>,
    } else {
    }
    %18 = arith.andi %0, %1 : i1
    %19 = arith.extui %18 : i1 to i32
    %c0_i32_14 = arith.constant 0 : i32
    %20 = arith.cmpi ne, %19, %c0_i32_14 : i32
    scf.if %20 {
      %c0_15 = arith.constant 0 : index
      %c0_16 = arith.constant 0 : index
      %21 = vector.load %arg10[%c0_15, %c0_16] : memref<16x128xf32, #tpu.memory_space<vmem>>, vector<16x128xf32>
      %c0_17 = arith.constant 0 : index
      %c0_18 = arith.constant 0 : index
      %22 = vector.load %arg7[%c0_17, %c0_18] : memref<1x128xf32, #tpu.memory_space<vmem>>, vector<1x128xf32>
      %23 = vector.broadcast %22 : vector<1x128xf32> to vector<16x128xf32>
      %24 = arith.addf %21, %23 : vector<16x128xf32>
      %c0_19 = arith.constant 0 : index
      %c0_20 = arith.constant 0 : index
      %25 = vector.load %arg8[%c0_19, %c0_20] : memref<16x128xf32, #tpu.memory_space<vmem>>, vector<16x128xf32>
      tpu.vector_store %arg8[%c0_19, %c0_20], %24 {strides = array<i32>} : memref<16x128xf32, #tpu.memory_space<vmem>>, vector<16x128xf32>,
    } else {
    }
    return
  }
  func.func @transform_0(%arg0: i32, %arg1: i32, %arg2: i32) -> (i32, i32) {
    %c0_i32 = arith.constant 0 : i32
    return %arg0, %arg2 : i32, i32
  }
  func.func @transform_1(%arg0: i32, %arg1: i32, %arg2: i32) -> (i32, i32) {
    %c0_i32 = arith.constant 0 : i32
    return %arg2, %arg1 : i32, i32
  }
  func.func @transform_2(%arg0: i32, %arg1: i32, %arg2: i32) -> (i32, i32) {
    %c0_i32 = arith.constant 0 : i32
    %c0_i32_0 = arith.constant 0 : i32
    return %c0_i32, %arg1 : i32, i32
  }
  func.func @transform_3(%arg0: i32, %arg1: i32, %arg2: i32) -> (i32, i32) {
    %c0_i32 = arith.constant 0 : i32
    %c0_i32_0 = arith.constant 0 : i32
    return %arg1, %c0_i32 : i32, i32
  }
  func.func @transform_4(%arg0: i32, %arg1: i32, %arg2: i32) -> (i32, i32) {
    %c0_i32 = arith.constant 0 : i32
    %c0_i32_0 = arith.constant 0 : i32
    %c0_i32_1 = arith.constant 0 : i32
    return %c0_i32, %c0_i32_0 : i32, i32
  }
  func.func @transform_5(%arg0: i32, %arg1: i32, %arg2: i32) -> (i32, i32) {
    %c0_i32 = arith.constant 0 : i32
    %c0_i32_0 = arith.constant 0 : i32
    return %arg0, %c0_i32 : i32, i32
  }
}

</mosaic_0001>

<llo_original>
// kernel: _lambda_.3
$region0: #{_lambda_.3}
  #allocation0 [shape = 'u32[]', space=smem, size = 0x4, offset = 0x4, fixed_abs, tag = 'smem constant byte address 0x4 - core index']
  #allocation1 [shape = 'u32[144,128]{1,0:T(1,128)}', space=vmem, size = 0x12000, scoped, tag = 'internal scratch']
  #allocation2 [shape = 'f32[16,256]{1,0:T(8,128)}', space=vmem, size = 0x4000, scoped, tag = 'scratch operand']
  %s0 = inlined_call_operand.vmem [shape: bf16[16,512], index: 0, kind: input, shape index: {}]
  %s1 = inlined_call_operand.vmem [shape: bf16[512,256], index: 1, kind: input, shape index: {}]
  %s2 = inlined_call_operand.vmem [shape: f32[1,256], index: 2, kind: input, shape index: {}]
  %s3 = inlined_call_operand.vmem [shape: bf16[16,256], index: 3, kind: output, shape index: {}]
  %s4 = sld [smem:[#allocation0]]
  $region30: #{_lambda_.3} parent=0
    _
  %s6 = ssub.s32 1, %s4
  %s7 = scalar_select 0, %s6, %s4
  // Predicated region
  $region2: #{_lambda_.3} parent=0 // pred_check
    _
  $region3: #{_lambda_.3} parent=0 // pred_check_branch
    %9 = sbr.rel (0) target = $region5
  $region4: #{_lambda_.3} parent=0 // pred_region
    _
  $region5: #{_lambda_.3} parent=0 // pred_fallthru
    _
  // Predicated region
  $region6: #{_lambda_.3} parent=0 // pred_check
    _
  $region7: #{_lambda_.3} parent=0 // pred_check_branch
    %11 = sbr.rel (0) target = $region9
  $region8: #{_lambda_.3} parent=0 // pred_region
    _
  $region9: #{_lambda_.3} parent=0 // pred_fallthru
    _
  // Predicated region
  $region10: #{_lambda_.3} parent=0 // pred_check
    _
  $region11: #{_lambda_.3} parent=0 // pred_check_branch
    %13 = sbr.rel (0) target = $region13
  $region12: #{_lambda_.3} parent=0 // pred_region
    _
  $region13: #{_lambda_.3} parent=0 // pred_fallthru
    _
  %p14 = scmp.eq.s32.totalorder 0, 0
  // Predicated region
  $region14: #{_lambda_.3} parent=0 // pred_check
    %p15 = pneg %p14
  $region15: #{_lambda_.3} parent=0 // pred_check_branch
    %17 = sbr.rel (%p15) target = $region17
  $region16: #{_lambda_.3} parent=0 // pred_region
    %18 = vst [vmem:[#allocation2] sm:$0xff] 0.0
    %19 = vst [vmem:[#allocation2 + $0x8] sm:$0xff] 0.0
    %20 = vst [vmem:[#allocation2 + $0x10] sm:$0xff] 0.0
    %21 = vst [vmem:[#allocation2 + $0x18] sm:$0xff] 0.0
  $region17: #{_lambda_.3} parent=0 // pred_fallthru
    _
  %v22 = vld [vmem:[#allocation2] sm:$0xff]
  %v23 = vld [vmem:[#allocation2 + $0x8] sm:$0xff]
  %v24 = vld [vmem:[#allocation2 + $0x10] sm:$0xff]
  %v25 = vld [vmem:[#allocation2 + $0x18] sm:$0xff]
  %v26 = vld [vmem:[%s0] sm:$0xff]
  %v27 = vld [vmem:[%s0 + $0x8] sm:$0xff]
  %v28 = vld [vmem:[%s0 + $0x10] sm:$0xff]
  %v29 = vld [vmem:[%s0 + $0x18] sm:$0xff]
  %v30 = vld [vmem:[%s1] sm:$0xff]
  %v31 = vld [vmem:[%s1 + $0x8] sm:$0xff]
  %v32 = vld [vmem:[%s1 + $0x10] sm:$0xff]
  %v33 = vld [vmem:[%s1 + $0x18] sm:$0xff]
  %v34 = vld [vmem:[%s1 + $0x20] sm:$0xff]
  %v35 = vld [vmem:[%s1 + $0x28] sm:$0xff]
  %v36 = vld [vmem:[%s1 + $0x30] sm:$0xff]
  %v37 = vld [vmem:[%s1 + $0x38] sm:$0xff]
  %v38 = vld [vmem:[%s1 + $0x40] sm:$0xff]
  %v39 = vld [vmem:[%s1 + $0x48] sm:$0xff]
  %v40 = vld [vmem:[%s1 + $0x50] sm:$0xff]
  %v41 = vld [vmem:[%s1 + $0x58] sm:$0xff]
  %v42 = vld [vmem:[%s1 + $0x60] sm:$0xff]
  %v43 = vld [vmem:[%s1 + $0x68] sm:$0xff]
  %v44 = vld [vmem:[%s1 + $0x70] sm:$0xff]
  %v45 = vld [vmem:[%s1 + $0x78] sm:$0xff]
  %v46 = vld [vmem:[%s1 + $0x80] sm:$0xff]
  %v47 = vld [vmem:[%s1 + $0x88] sm:$0xff]
  %v48 = vld [vmem:[%s1 + $0x90] sm:$0xff]
  %v49 = vld [vmem:[%s1 + $0x98] sm:$0xff]
  %v50 = vld [vmem:[%s1 + $0xa0] sm:$0xff]
  %v51 = vld [vmem:[%s1 + $0xa8] sm:$0xff]
  %v52 = vld [vmem:[%s1 + $0xb0] sm:$0xff]
  %v53 = vld [vmem:[%s1 + $0xb8] sm:$0xff]
  %v54 = vld [vmem:[%s1 + $0xc0] sm:$0xff]
  %v55 = vld [vmem:[%s1 + $0xc8] sm:$0xff]
  %v56 = vld [vmem:[%s1 + $0xd0] sm:$0xff]
  %v57 = vld [vmem:[%s1 + $0xd8] sm:$0xff]
  %v58 = vld [vmem:[%s1 + $0xe0] sm:$0xff]
  %v59 = vld [vmem:[%s1 + $0xe8] sm:$0xff]
  %v60 = vld [vmem:[%s1 + $0xf0] sm:$0xff]
  %v61 = vld [vmem:[%s1 + $0xf8] sm:$0xff]
  %v62 = vld [vmem:[%s1 + $0x100] sm:$0xff]
  %v63 = vld [vmem:[%s1 + $0x108] sm:$0xff]
  %v64 = vld [vmem:[%s1 + $0x110] sm:$0xff]
  %v65 = vld [vmem:[%s1 + $0x118] sm:$0xff]
  %v66 = vld [vmem:[%s1 + $0x120] sm:$0xff]
  %v67 = vld [vmem:[%s1 + $0x128] sm:$0xff]
  %v68 = vld [vmem:[%s1 + $0x130] sm:$0xff]
  %v69 = vld [vmem:[%s1 + $0x138] sm:$0xff]
  %v70 = vld [vmem:[%s1 + $0x140] sm:$0xff]
  %v71 = vld [vmem:[%s1 + $0x148] sm:$0xff]
  %v72 = vld [vmem:[%s1 + $0x150] sm:$0xff]
  %v73 = vld [vmem:[%s1 + $0x158] sm:$0xff]
  %v74 = vld [vmem:[%s1 + $0x160] sm:$0xff]
  %v75 = vld [vmem:[%s1 + $0x168] sm:$0xff]
  %v76 = vld [vmem:[%s1 + $0x170] sm:$0xff]
  %v77 = vld [vmem:[%s1 + $0x178] sm:$0xff]
  %v78 = vld [vmem:[%s1 + $0x180] sm:$0xff]
  %v79 = vld [vmem:[%s1 + $0x188] sm:$0xff]
  %v80 = vld [vmem:[%s1 + $0x190] sm:$0xff]
  %v81 = vld [vmem:[%s1 + $0x198] sm:$0xff]
  %v82 = vld [vmem:[%s1 + $0x1a0] sm:$0xff]
  %v83 = vld [vmem:[%s1 + $0x1a8] sm:$0xff]
  %v84 = vld [vmem:[%s1 + $0x1b0] sm:$0xff]
  %v85 = vld [vmem:[%s1 + $0x1b8] sm:$0xff]
  %v86 = vld [vmem:[%s1 + $0x1c0] sm:$0xff]
  %v87 = vld [vmem:[%s1 + $0x1c8] sm:$0xff]
  %v88 = vld [vmem:[%s1 + $0x1d0] sm:$0xff]
  %v89 = vld [vmem:[%s1 + $0x1d8] sm:$0xff]
  %v90 = vld [vmem:[%s1 + $0x1e0] sm:$0xff]
  %v91 = vld [vmem:[%s1 + $0x1e8] sm:$0xff]
  %v92 = vld [vmem:[%s1 + $0x1f0] sm:$0xff]
  %v93 = vld [vmem:[%s1 + $0x1f8] sm:$0xff]
  %v98 = vunpack.c.l.b16 %v26
  %v99 = vunpack.c.h.b16 %v26
  %v100 = vunpack.c.l.b16 %v27
  %v101 = vunpack.c.h.b16 %v27
  %v102 = vunpack.c.l.b16 %v28
  %v103 = vunpack.c.h.b16 %v28
  %v104 = vunpack.c.l.b16 %v29
  %v105 = vunpack.c.h.b16 %v29
  %v106 = vpack.c.b16 %v102, %v98
  %v107 = vpack.c.b16 %v103, %v99
  %v108 = vpack.c.b16 %v104, %v100
  %v109 = vpack.c.b16 %v105, %v101
  %v178 = vunpack.c.l.b16 %v30
  %v179 = vunpack.c.h.b16 %v30
  %v180 = vunpack.c.l.b16 %v31
  %v181 = vunpack.c.h.b16 %v31
  %v182 = vunpack.c.l.b16 %v32
  %v183 = vunpack.c.h.b16 %v32
  %v184 = vunpack.c.l.b16 %v33
  %v185 = vunpack.c.h.b16 %v33
  %v186 = vunpack.c.l.b16 %v34
  %v187 = vunpack.c.h.b16 %v34
  %v188 = vunpack.c.l.b16 %v35
  %v189 = vunpack.c.h.b16 %v35
  %v190 = vunpack.c.l.b16 %v36
  %v191 = vunpack.c.h.b16 %v36
  %v192 = vunpack.c.l.b16 %v37
  %v193 = vunpack.c.h.b16 %v37
  %v194 = vunpack.c.l.b16 %v38
  %v195 = vunpack.c.h.b16 %v38
  %v196 = vunpack.c.l.b16 %v39
  %v197 = vunpack.c.h.b16 %v39
  %v198 = vunpack.c.l.b16 %v40
  %v199 = vunpack.c.h.b16 %v40
  %v200 = vunpack.c.l.b16 %v41
  %v201 = vunpack.c.h.b16 %v41
  %v202 = vunpack.c.l.b16 %v42
  %v203 = vunpack.c.h.b16 %v42
  %v204 = vunpack.c.l.b16 %v43
  %v205 = vunpack.c.h.b16 %v43
  %v206 = vunpack.c.l.b16 %v44
  %v207 = vunpack.c.h.b16 %v44
  %v208 = vunpack.c.l.b16 %v45
  %v209 = vunpack.c.h.b16 %v45
  %v210 = vunpack.c.l.b16 %v46
  %v211 = vunpack.c.h.b16 %v46
  %v212 = vunpack.c.l.b16 %v47
  %v213 = vunpack.c.h.b16 %v47
  %v214 = vunpack.c.l.b16 %v48
  %v215 = vunpack.c.h.b16 %v48
  %v216 = vunpack.c.l.b16 %v49
  %v217 = vunpack.c.h.b16 %v49
  %v218 = vunpack.c.l.b16 %v50
  %v219 = vunpack.c.h.b16 %v50
  %v220 = vunpack.c.l.b16 %v51
  %v221 = vunpack.c.h.b16 %v51
  %v222 = vunpack.c.l.b16 %v52
  %v223 = vunpack.c.h.b16 %v52
  %v224 = vunpack.c.l.b16 %v53
  %v225 = vunpack.c.h.b16 %v53
  %v226 = vunpack.c.l.b16 %v54
  %v227 = vunpack.c.h.b16 %v54
  %v228 = vunpack.c.l.b16 %v55
  %v229 = vunpack.c.h.b16 %v55
  %v230 = vunpack.c.l.b16 %v56
  %v231 = vunpack.c.h.b16 %v56
  %v232 = vunpack.c.l.b16 %v57
  %v233 = vunpack.c.h.b16 %v57
  %v234 = vunpack.c.l.b16 %v58
  %v235 = vunpack.c.h.b16 %v58
  %v236 = vunpack.c.l.b16 %v59
  %v237 = vunpack.c.h.b16 %v59
  %v238 = vunpack.c.l.b16 %v60
  %v239 = vunpack.c.h.b16 %v60
  %v240 = vunpack.c.l.b16 %v61
  %v241 = vunpack.c.h.b16 %v61
  %v242 = vunpack.c.l.b16 %v62
  %v243 = vunpack.c.h.b16 %v62
  %v244 = vunpack.c.l.b16 %v63
  %v245 = vunpack.c.h.b16 %v63
  %v246 = vunpack.c.l.b16 %v64
  %v247 = vunpack.c.h.b16 %v64
  %v248 = vunpack.c.l.b16 %v65
  %v249 = vunpack.c.h.b16 %v65
  %v250 = vunpack.c.l.b16 %v66
  %v251 = vunpack.c.h.b16 %v66
  %v252 = vunpack.c.l.b16 %v67
  %v253 = vunpack.c.h.b16 %v67
  %v254 = vunpack.c.l.b16 %v68
  %v255 = vunpack.c.h.b16 %v68
  %v256 = vunpack.c.l.b16 %v69
  %v257 = vunpack.c.h.b16 %v69
  %v258 = vunpack.c.l.b16 %v70
  %v259 = vunpack.c.h.b16 %v70
  %v260 = vunpack.c.l.b16 %v71
  %v261 = vunpack.c.h.b16 %v71
  %v262 = vunpack.c.l.b16 %v72
  %v263 = vunpack.c.h.b16 %v72
  %v264 = vunpack.c.l.b16 %v73
  %v265 = vunpack.c.h.b16 %v73
  %v266 = vunpack.c.l.b16 %v74
  %v267 = vunpack.c.h.b16 %v74
  %v268 = vunpack.c.l.b16 %v75
  %v269 = vunpack.c.h.b16 %v75
  %v270 = vunpack.c.l.b16 %v76
  %v271 = vunpack.c.h.b16 %v76
  %v272 = vunpack.c.l.b16 %v77
  %v273 = vunpack.c.h.b16 %v77
  %v274 = vunpack.c.l.b16 %v78
  %v275 = vunpack.c.h.b16 %v78
  %v276 = vunpack.c.l.b16 %v79
  %v277 = vunpack.c.h.b16 %v79
  %v278 = vunpack.c.l.b16 %v80
  %v279 = vunpack.c.h.b16 %v80
  %v280 = vunpack.c.l.b16 %v81
  %v281 = vunpack.c.h.b16 %v81
  %v282 = vunpack.c.l.b16 %v82
  %v283 = vunpack.c.h.b16 %v82
  %v284 = vunpack.c.l.b16 %v83
  %v285 = vunpack.c.h.b16 %v83
  %v286 = vunpack.c.l.b16 %v84
  %v287 = vunpack.c.h.b16 %v84
  %v288 = vunpack.c.l.b16 %v85
  %v289 = vunpack.c.h.b16 %v85
  %v290 = vunpack.c.l.b16 %v86
  %v291 = vunpack.c.h.b16 %v86
  %v292 = vunpack.c.l.b16 %v87
  %v293 = vunpack.c.h.b16 %v87
  %v294 = vunpack.c.l.b16 %v88
  %v295 = vunpack.c.h.b16 %v88
  %v296 = vunpack.c.l.b16 %v89
  %v297 = vunpack.c.h.b16 %v89
  %v298 = vunpack.c.l.b16 %v90
  %v299 = vunpack.c.h.b16 %v90
  %v300 = vunpack.c.l.b16 %v91
  %v301 = vunpack.c.h.b16 %v91
  %v302 = vunpack.c.l.b16 %v92
  %v303 = vunpack.c.h.b16 %v92
  %v304 = vunpack.c.l.b16 %v93
  %v305 = vunpack.c.h.b16 %v93
  %v306 = vpack.c.b16 %v180, %v178
  %v307 = vpack.c.b16 %v181, %v179
  %v308 = vpack.c.b16 %v184, %v182
  %v309 = vpack.c.b16 %v185, %v183
  %v310 = vpack.c.b16 %v188, %v186
  %v311 = vpack.c.b16 %v189, %v187
  %v312 = vpack.c.b16 %v192, %v190
  %v313 = vpack.c.b16 %v193, %v191
  %v314 = vpack.c.b16 %v196, %v194
  %v315 = vpack.c.b16 %v197, %v195
  %v316 = vpack.c.b16 %v200, %v198
  %v317 = vpack.c.b16 %v201, %v199
  %v318 = vpack.c.b16 %v204, %v202
  %v319 = vpack.c.b16 %v205, %v203
  %v320 = vpack.c.b16 %v208, %v206
  %v321 = vpack.c.b16 %v209, %v207
  %v322 = vpack.c.b16 %v212, %v210
  %v323 = vpack.c.b16 %v213, %v211
  %v324 = vpack.c.b16 %v216, %v214
  %v325 = vpack.c.b16 %v217, %v215
  %v326 = vpack.c.b16 %v220, %v218
  %v327 = vpack.c.b16 %v221, %v219
  %v328 = vpack.c.b16 %v224, %v222
  %v329 = vpack.c.b16 %v225, %v223
  %v330 = vpack.c.b16 %v228, %v226
  %v331 = vpack.c.b16 %v229, %v227
  %v332 = vpack.c.b16 %v232, %v230
  %v333 = vpack.c.b16 %v233, %v231
  %v334 = vpack.c.b16 %v236, %v234
  %v335 = vpack.c.b16 %v237, %v235
  %v336 = vpack.c.b16 %v240, %v238
  %v337 = vpack.c.b16 %v241, %v239
  %v338 = vpack.c.b16 %v244, %v242
  %v339 = vpack.c.b16 %v245, %v243
  %v340 = vpack.c.b16 %v248, %v246
  %v341 = vpack.c.b16 %v249, %v247
  %v342 = vpack.c.b16 %v252, %v250
  %v343 = vpack.c.b16 %v253, %v251
  %v344 = vpack.c.b16 %v256, %v254
  %v345 = vpack.c.b16 %v257, %v255
  %v346 = vpack.c.b16 %v260, %v258
  %v347 = vpack.c.b16 %v261, %v259
  %v348 = vpack.c.b16 %v264, %v262
  %v349 = vpack.c.b16 %v265, %v263
  %v350 = vpack.c.b16 %v268, %v266
  %v351 = vpack.c.b16 %v269, %v267
  %v352 = vpack.c.b16 %v272, %v270
  %v353 = vpack.c.b16 %v273, %v271
  %v354 = vpack.c.b16 %v276, %v274
  %v355 = vpack.c.b16 %v277, %v275
  %v356 = vpack.c.b16 %v280, %v278
  %v357 = vpack.c.b16 %v281, %v279
  %v358 = vpack.c.b16 %v284, %v282
  %v359 = vpack.c.b16 %v285, %v283
  %v360 = vpack.c.b16 %v288, %v286
  %v361 = vpack.c.b16 %v289, %v287
  %v362 = vpack.c.b16 %v292, %v290
  %v363 = vpack.c.b16 %v293, %v291
  %v364 = vpack.c.b16 %v296, %v294
  %v365 = vpack.c.b16 %v297, %v295
  %v366 = vpack.c.b16 %v300, %v298
  %v367 = vpack.c.b16 %v301, %v299
  %v368 = vpack.c.b16 %v304, %v302
  %v369 = vpack.c.b16 %v305, %v303
  %434 = vmatprep.subr.bf16.mxu0 %v307
  %435 = vmatpush1.bf16.msra.mxu0 %v306
  %436 = vmatprep.subr.bf16.mxu0 %v309
  %437 = vmatpush1.bf16.msra.mxu0 %v308
  %438 = vmatprep.subr.bf16.mxu0 %v311
  %439 = vmatpush1.bf16.msra.mxu0 %v310
  %440 = vmatprep.subr.bf16.mxu0 %v313
  %441 = vmatpush1.bf16.msra.mxu0 %v312
  %442 = vmatprep.subr.bf16.mxu0 %v315
  %443 = vmatpush1.bf16.msra.mxu0 %v314
  %444 = vmatprep.subr.bf16.mxu0 %v317
  %445 = vmatpush1.bf16.msra.mxu0 %v316
  %446 = vmatprep.subr.bf16.mxu0 %v319
  %447 = vmatpush1.bf16.msra.mxu0 %v318
  %448 = vmatprep.subr.bf16.mxu0 %v321
  %449 = vmatpush1.bf16.msra.mxu0 %v320
  %450 = vmatprep.subr.bf16.mxu0 %v323
  %451 = vmatpush1.bf16.msra.mxu0 %v322
  %452 = vmatprep.subr.bf16.mxu0 %v325
  %453 = vmatpush1.bf16.msra.mxu0 %v324
  %454 = vmatprep.subr.bf16.mxu0 %v327
  %455 = vmatpush1.bf16.msra.mxu0 %v326
  %456 = vmatprep.subr.bf16.mxu0 %v329
  %457 = vmatpush1.bf16.msra.mxu0 %v328
  %458 = vmatprep.subr.bf16.mxu0 %v331
  %459 = vmatpush1.bf16.msra.mxu0 %v330
  %460 = vmatprep.subr.bf16.mxu0 %v333
  %461 = vmatpush1.bf16.msra.mxu0 %v332
  %462 = vmatprep.subr.bf16.mxu0 %v335
  %463 = vmatpush1.bf16.msra.mxu0 %v334
  %464 = vmatprep.subr.bf16.mxu0 %v337
  %465 = vmatpush1.bf16.msra.mxu0 %v336
  %466 = vmatprep.mubr.bf16.mxu0 %v107
  %467 = vmatmul.mubr.bf16.gmra.mrb[0].mxu0 %v106
  %v468 = vpop.f32.mrb[0].mxu0
  %v469 = vadd.f32 0.0, %v468
  %v470 = vpop.f32.mrb[0].mxu0
  %v471 = vadd.f32 0.0, %v470
  %v472 = vpop.f32.mrb[0].mxu0
  %v473 = vadd.f32 0.0, %v472
  %v474 = vpop.f32.mrb[0].mxu0
  %v475 = vadd.f32 0.0, %v474
  %476 = vdwg.mxu0
  %477 = vmatprep.subr.bf16.mxu0 %v339
  %478 = vmatpush1.bf16.msra.mxu0 %v338
  %479 = vmatprep.subr.bf16.mxu0 %v341
  %480 = vmatpush1.bf16.msra.mxu0 %v340
  %481 = vmatprep.subr.bf16.mxu0 %v343
  %482 = vmatpush1.bf16.msra.mxu0 %v342
  %483 = vmatprep.subr.bf16.mxu0 %v345
  %484 = vmatpush1.bf16.msra.mxu0 %v344
  %485 = vmatprep.subr.bf16.mxu0 %v347
  %486 = vmatpush1.bf16.msra.mxu0 %v346
  %487 = vmatprep.subr.bf16.mxu0 %v349
  %488 = vmatpush1.bf16.msra.mxu0 %v348
  %489 = vmatprep.subr.bf16.mxu0 %v351
  %490 = vmatpush1.bf16.msra.mxu0 %v350
  %491 = vmatprep.subr.bf16.mxu0 %v353
  %492 = vmatpush1.bf16.msra.mxu0 %v352
  %493 = vmatprep.subr.bf16.mxu0 %v355
  %494 = vmatpush1.bf16.msra.mxu0 %v354
  %495 = vmatprep.subr.bf16.mxu0 %v357
  %496 = vmatpush1.bf16.msra.mxu0 %v356
  %497 = vmatprep.subr.bf16.mxu0 %v359
  %498 = vmatpush1.bf16.msra.mxu0 %v358
  %499 = vmatprep.subr.bf16.mxu0 %v361
  %500 = vmatpush1.bf16.msra.mxu0 %v360
  %501 = vmatprep.subr.bf16.mxu0 %v363
  %502 = vmatpush1.bf16.msra.mxu0 %v362
  %503 = vmatprep.subr.bf16.mxu0 %v365
  %504 = vmatpush1.bf16.msra.mxu0 %v364
  %505 = vmatprep.subr.bf16.mxu0 %v367
  %506 = vmatpush1.bf16.msra.mxu0 %v366
  %507 = vmatprep.subr.bf16.mxu0 %v369
  %508 = vmatpush1.bf16.msra.mxu0 %v368
  %509 = vmatprep.mubr.bf16.mxu0 %v109
  %510 = vmatmul.mubr.bf16.gmra.mrb[0].mxu0 %v108
  %v511 = vpop.f32.mrb[0].mxu0
  %v512 = vadd.f32 %v469, %v511
  %v513 = vpop.f32.mrb[0].mxu0
  %v514 = vadd.f32 %v471, %v513
  %v515 = vpop.f32.mrb[0].mxu0
  %v516 = vadd.f32 %v473, %v515
  %v517 = vpop.f32.mrb[0].mxu0
  %v518 = vadd.f32 %v475, %v517
  %519 = vdwg.mxu0
  %v520 = vadd.f32 %v22, %v512
  %v521 = vadd.f32 %v23, %v514
  %v522 = vadd.f32 %v24, %v516
  %v523 = vadd.f32 %v25, %v518
  %524 = vst [vmem:[#allocation2] sm:$0xff] %v520
  %525 = vst [vmem:[#allocation2 + $0x8] sm:$0xff] %v521
  %526 = vst [vmem:[#allocation2 + $0x10] sm:$0xff] %v522
  %527 = vst [vmem:[#allocation2 + $0x18] sm:$0xff] %v523
  // Predicated region
  $region18: #{_lambda_.3} parent=0 // pred_check
    %p528 = pneg %p14
  $region19: #{_lambda_.3} parent=0 // pred_check_branch
    %530 = sbr.rel (%p528) target = $region21
  $region20: #{_lambda_.3} parent=0 // pred_region
    %v531 = vld [vmem:[#allocation2] sm:$0xff]
    %v532 = vld [vmem:[#allocation2 + $0x8] sm:$0xff]
    %v533 = vld [vmem:[#allocation2 + $0x10] sm:$0xff]
    %v534 = vld [vmem:[#allocation2 + $0x18] sm:$0xff]
    %v535 = vld [vmem:[%s2] sm:$0x3]
    %v537 = vlaneseq
    %v538 = vshrl.u32 %v537, 7
    %v539 = vsub.s32 0, %v538
    %v540 = vrot.slane %v535, %v539
    %v541 = vlaneseq
    %v542 = vshrl.u32 %v541, 7
    %v543 = vsub.s32 1, %v542
    %v544 = vrot.slane %v535, %v543
    %v547 = vadd.f32 %v531, %v540
    %v548 = vadd.f32 %v532, %v544
    %v549 = vadd.f32 %v533, %v540
    %v550 = vadd.f32 %v534, %v544
    %v551 = vmax.f32 %v547, 0.0
    %v552 = vmax.f32 %v548, 0.0
    %v553 = vmax.f32 %v549, 0.0
    %v554 = vmax.f32 %v550, 0.0
    %v555 = vpack.c.bf16 %v553, %v551
    %v556 = vpack.c.bf16 %v554, %v552
    %v559 = vunpack.c.l.b16 %v555
    %v560 = vunpack.c.l.b16 %v556
    %v561 = vunpack.c.h.b16 %v555
    %v562 = vunpack.c.h.b16 %v556
    %v563 = vpack.c.b16 %v560, %v559
    %v564 = vpack.c.b16 %v562, %v561
    %567 = vst [vmem:[%s3] sm:$0xff] %v563
    %568 = vst [vmem:[%s3 + $0x8] sm:$0xff] %v564
  $region21: #{_lambda_.3} parent=0 // pred_fallthru
    _
  // Predicated region
  $region22: #{_lambda_.3} parent=0 // pred_check
    _
  $region23: #{_lambda_.3} parent=0 // pred_check_branch
    %570 = sbr.rel (0) target = $region25
  $region24: #{_lambda_.3} parent=0 // pred_region
    _
  $region25: #{_lambda_.3} parent=0 // pred_fallthru
    _
  // Predicated region
  $region26: #{_lambda_.3} parent=0 // pred_check
    _
  $region27: #{_lambda_.3} parent=0 // pred_check_branch
    %572 = sbr.rel (0) target = $region29
  $region28: #{_lambda_.3} parent=0 // pred_region
    _
  $region29: #{_lambda_.3} parent=0 // pred_fallthru
    _

// kernel: _lambda_.4
$region0: #{_lambda_.4}
  #allocation0 [shape = 'u32[]', space=smem, size = 0x4, offset = 0x4, fixed_abs, tag = 'smem constant byte address 0x4 - core index']
  #allocation1 [shape = 'u32[144,128]{1,0:T(1,128)}', space=vmem, size = 0x12000, scoped, tag = 'internal scratch']
  #allocation2 [shape = 'f32[16,256]{1,0:T(8,128)}', space=vmem, size = 0x4000, scoped, tag = 'scratch operand']
  #allocation3 [shape = 'f32[16,128]{1,0:T(8,128)}', space=vmem, size = 0x2000, scoped, tag = 'scratch operand']
  %s0 = inlined_call_operand.vmem [shape: bf16[16,256], index: 0, kind: input, shape index: {}]
  %s1 = inlined_call_operand.vmem [shape: bf16[256,256], index: 1, kind: input, shape index: {}]
  %s2 = inlined_call_operand.vmem [shape: f32[1,256], index: 2, kind: input, shape index: {}]
  %s3 = inlined_call_operand.vmem [shape: bf16[256,128], index: 3, kind: input, shape index: {}]
  %s4 = inlined_call_operand.vmem [shape: f32[1,128], index: 4, kind: input, shape index: {}]
  %s5 = inlined_call_operand.hbm [shape: f32[16,128], index: 5, kind: output, shape index: {}]
  %s6 = sld [smem:[#allocation0]]
  $region46: #{_lambda_.4} parent=0
    _
  %s8 = ssub.s32 1, %s6
  %s9 = scalar_select 0, %s8, %s6
  $region1: #{_lambda_.4} parent=0
    #allocation4 [shape = 'u8[8192]{0}', space=vmem, size = 0x2000, scoped, tag = 'output window, operand 0, single buffered']
    #allocation5 [shape = 's32[1]{0}', space=sflag, size = 0x4, scoped, tag = 'scoped memory for _lambda_.4']
    %10 = vsyncpa [#allocation5], 0
    // Predicated region
    $region2: #{_lambda_.4} parent=1 // pred_check
      _
    $region3: #{_lambda_.4} parent=1 // pred_check_branch
      %12 = sbr.rel (0) target = $region5
    $region4: #{_lambda_.4} parent=1 // pred_region
      _
    $region5: #{_lambda_.4} parent=1 // pred_fallthru
      _
    // Predicated region
    $region6: #{_lambda_.4} parent=1 // pred_check
      _
    $region7: #{_lambda_.4} parent=1 // pred_check_branch
      %14 = sbr.rel (0) target = $region9
    $region8: #{_lambda_.4} parent=1 // pred_region
      _
    $region9: #{_lambda_.4} parent=1 // pred_fallthru
      _
    // Predicated region
    $region10: #{_lambda_.4} parent=1 // pred_check
      _
    $region11: #{_lambda_.4} parent=1 // pred_check_branch
      %16 = sbr.rel (0) target = $region13
    $region12: #{_lambda_.4} parent=1 // pred_region
      _
    $region13: #{_lambda_.4} parent=1 // pred_fallthru
      _
    // Predicated region
    $region14: #{_lambda_.4} parent=1 // pred_check
      _
    $region15: #{_lambda_.4} parent=1 // pred_check_branch
      %18 = sbr.rel (0) target = $region17
    $region16: #{_lambda_.4} parent=1 // pred_region
      _
    $region17: #{_lambda_.4} parent=1 // pred_fallthru
      _
    // Predicated region
    $region18: #{_lambda_.4} parent=1 // pred_check
      _
    $region19: #{_lambda_.4} parent=1 // pred_check_branch
      %20 = sbr.rel (0) target = $region21
    $region20: #{_lambda_.4} parent=1 // pred_region
      _
    $region21: #{_lambda_.4} parent=1 // pred_fallthru
      _
    %p22 = scmp.eq.s32.totalorder 0, 0
    %p23 = scmp.eq.s32.totalorder 0, 0
    // Predicated region
    $region22: #{_lambda_.4} parent=1 // pred_check
      %p24 = pneg %p22
    $region23: #{_lambda_.4} parent=1 // pred_check_branch
      %26 = sbr.rel (%p24) target = $region25
    $region24: #{_lambda_.4} parent=1 // pred_region
      %27 = vst [vmem:[#allocation2] sm:$0xff] 0.0
      %28 = vst [vmem:[#allocation2 + $0x8] sm:$0xff] 0.0
      %29 = vst [vmem:[#allocation2 + $0x10] sm:$0xff] 0.0
      %30 = vst [vmem:[#allocation2 + $0x18] sm:$0xff] 0.0
    $region25: #{_lambda_.4} parent=1 // pred_fallthru
      _
    %p31 = pnand %p23, %p22
    %p32 = pneg %p31
    // Predicated region
    $region26: #{_lambda_.4} parent=1 // pred_check
      _
    $region27: #{_lambda_.4} parent=1 // pred_check_branch
      %34 = sbr.rel (%p31) target = $region29
    $region28: #{_lambda_.4} parent=1 // pred_region
      %35 = vst [vmem:[#allocation3] sm:$0xff] 0.0
      %36 = vst [vmem:[#allocation3 + $0x8] sm:$0xff] 0.0
    $region29: #{_lambda_.4} parent=1 // pred_fallthru
      _
    %v37 = vld [vmem:[#allocation2] sm:$0xff]
    %v38 = vld [vmem:[#allocation2 + $0x8] sm:$0xff]
    %v39 = vld [vmem:[#allocation2 + $0x10] sm:$0xff]
    %v40 = vld [vmem:[#allocation2 + $0x18] sm:$0xff]
    %v41 = vld [vmem:[%s0] sm:$0xff]
    %v42 = vld [vmem:[%s0 + $0x8] sm:$0xff]
    %v43 = vld [vmem:[%s1] sm:$0xff]
    %v44 = vld [vmem:[%s1 + $0x8] sm:$0xff]
    %v45 = vld [vmem:[%s1 + $0x10] sm:$0xff]
    %v46 = vld [vmem:[%s1 + $0x18] sm:$0xff]
    %v47 = vld [vmem:[%s1 + $0x20] sm:$0xff]
    %v48 = vld [vmem:[%s1 + $0x28] sm:$0xff]
    %v49 = vld [vmem:[%s1 + $0x30] sm:$0xff]
    %v50 = vld [vmem:[%s1 + $0x38] sm:$0xff]
    %v51 = vld [vmem:[%s1 + $0x40] sm:$0xff]
    %v52 = vld [vmem:[%s1 + $0x48] sm:$0xff]
    %v53 = vld [vmem:[%s1 + $0x50] sm:$0xff]
    %v54 = vld [vmem:[%s1 + $0x58] sm:$0xff]
    %v55 = vld [vmem:[%s1 + $0x60] sm:$0xff]
    %v56 = vld [vmem:[%s1 + $0x68] sm:$0xff]
    %v57 = vld [vmem:[%s1 + $0x70] sm:$0xff]
    %v58 = vld [vmem:[%s1 + $0x78] sm:$0xff]
    %v59 = vld [vmem:[%s1 + $0x80] sm:$0xff]
    %v60 = vld [vmem:[%s1 + $0x88] sm:$0xff]
    %v61 = vld [vmem:[%s1 + $0x90] sm:$0xff]
    %v62 = vld [vmem:[%s1 + $0x98] sm:$0xff]
    %v63 = vld [vmem:[%s1 + $0xa0] sm:$0xff]
    %v64 = vld [vmem:[%s1 + $0xa8] sm:$0xff]
    %v65 = vld [vmem:[%s1 + $0xb0] sm:$0xff]
    %v66 = vld [vmem:[%s1 + $0xb8] sm:$0xff]
    %v67 = vld [vmem:[%s1 + $0xc0] sm:$0xff]
    %v68 = vld [vmem:[%s1 + $0xc8] sm:$0xff]
    %v69 = vld [vmem:[%s1 + $0xd0] sm:$0xff]
    %v70 = vld [vmem:[%s1 + $0xd8] sm:$0xff]
    %v71 = vld [vmem:[%s1 + $0xe0] sm:$0xff]
    %v72 = vld [vmem:[%s1 + $0xe8] sm:$0xff]
    %v73 = vld [vmem:[%s1 + $0xf0] sm:$0xff]
    %v74 = vld [vmem:[%s1 + $0xf8] sm:$0xff]
    %v77 = vunpack.c.l.b16 %v41
    %v78 = vunpack.c.h.b16 %v41
    %v79 = vunpack.c.l.b16 %v42
    %v80 = vunpack.c.h.b16 %v42
    %v81 = vpack.c.b16 %v79, %v77
    %v82 = vpack.c.b16 %v80, %v78
    %v117 = vunpack.c.l.b16 %v43
    %v118 = vunpack.c.h.b16 %v43
    %v119 = vunpack.c.l.b16 %v44
    %v120 = vunpack.c.h.b16 %v44
    %v121 = vunpack.c.l.b16 %v45
    %v122 = vunpack.c.h.b16 %v45
    %v123 = vunpack.c.l.b16 %v46
    %v124 = vunpack.c.h.b16 %v46
    %v125 = vunpack.c.l.b16 %v47
    %v126 = vunpack.c.h.b16 %v47
    %v127 = vunpack.c.l.b16 %v48
    %v128 = vunpack.c.h.b16 %v48
    %v129 = vunpack.c.l.b16 %v49
    %v130 = vunpack.c.h.b16 %v49
    %v131 = vunpack.c.l.b16 %v50
    %v132 = vunpack.c.h.b16 %v50
    %v133 = vunpack.c.l.b16 %v51
    %v134 = vunpack.c.h.b16 %v51
    %v135 = vunpack.c.l.b16 %v52
    %v136 = vunpack.c.h.b16 %v52
    %v137 = vunpack.c.l.b16 %v53
    %v138 = vunpack.c.h.b16 %v53
    %v139 = vunpack.c.l.b16 %v54
    %v140 = vunpack.c.h.b16 %v54
    %v141 = vunpack.c.l.b16 %v55
    %v142 = vunpack.c.h.b16 %v55
    %v143 = vunpack.c.l.b16 %v56
    %v144 = vunpack.c.h.b16 %v56
    %v145 = vunpack.c.l.b16 %v57
    %v146 = vunpack.c.h.b16 %v57
    %v147 = vunpack.c.l.b16 %v58
    %v148 = vunpack.c.h.b16 %v58
    %v149 = vunpack.c.l.b16 %v59
    %v150 = vunpack.c.h.b16 %v59
    %v151 = vunpack.c.l.b16 %v60
    %v152 = vunpack.c.h.b16 %v60
    %v153 = vunpack.c.l.b16 %v61
    %v154 = vunpack.c.h.b16 %v61
    %v155 = vunpack.c.l.b16 %v62
    %v156 = vunpack.c.h.b16 %v62
    %v157 = vunpack.c.l.b16 %v63
    %v158 = vunpack.c.h.b16 %v63
    %v159 = vunpack.c.l.b16 %v64
    %v160 = vunpack.c.h.b16 %v64
    %v161 = vunpack.c.l.b16 %v65
    %v162 = vunpack.c.h.b16 %v65
    %v163 = vunpack.c.l.b16 %v66
    %v164 = vunpack.c.h.b16 %v66
    %v165 = vunpack.c.l.b16 %v67
    %v166 = vunpack.c.h.b16 %v67
    %v167 = vunpack.c.l.b16 %v68
    %v168 = vunpack.c.h.b16 %v68
    %v169 = vunpack.c.l.b16 %v69
    %v170 = vunpack.c.h.b16 %v69
    %v171 = vunpack.c.l.b16 %v70
    %v172 = vunpack.c.h.b16 %v70
    %v173 = vunpack.c.l.b16 %v71
    %v174 = vunpack.c.h.b16 %v71
    %v175 = vunpack.c.l.b16 %v72
    %v176 = vunpack.c.h.b16 %v72
    %v177 = vunpack.c.l.b16 %v73
    %v178 = vunpack.c.h.b16 %v73
    %v179 = vunpack.c.l.b16 %v74
    %v180 = vunpack.c.h.b16 %v74
    %v181 = vpack.c.b16 %v119, %v117
    %v182 = vpack.c.b16 %v120, %v118
    %v183 = vpack.c.b16 %v123, %v121
    %v184 = vpack.c.b16 %v124, %v122
    %v185 = vpack.c.b16 %v127, %v125
    %v186 = vpack.c.b16 %v128, %v126
    %v187 = vpack.c.b16 %v131, %v129
    %v188 = vpack.c.b16 %v132, %v130
    %v189 = vpack.c.b16 %v135, %v133
    %v190 = vpack.c.b16 %v136, %v134
    %v191 = vpack.c.b16 %v139, %v137
    %v192 = vpack.c.b16 %v140, %v138
    %v193 = vpack.c.b16 %v143, %v141
    %v194 = vpack.c.b16 %v144, %v142
    %v195 = vpack.c.b16 %v147, %v145
    %v196 = vpack.c.b16 %v148, %v146
    %v197 = vpack.c.b16 %v151, %v149
    %v198 = vpack.c.b16 %v152, %v150
    %v199 = vpack.c.b16 %v155, %v153
    %v200 = vpack.c.b16 %v156, %v154
    %v201 = vpack.c.b16 %v159, %v157
    %v202 = vpack.c.b16 %v160, %v158
    %v203 = vpack.c.b16 %v163, %v161
    %v204 = vpack.c.b16 %v164, %v162
    %v205 = vpack.c.b16 %v167, %v165
    %v206 = vpack.c.b16 %v168, %v166
    %v207 = vpack.c.b16 %v171, %v169
    %v208 = vpack.c.b16 %v172, %v170
    %v209 = vpack.c.b16 %v175, %v173
    %v210 = vpack.c.b16 %v176, %v174
    %v211 = vpack.c.b16 %v179, %v177
    %v212 = vpack.c.b16 %v180, %v178
    %245 = vmatprep.subr.bf16.mxu0 %v182
    %246 = vmatpush1.bf16.msra.mxu0 %v181
    %247 = vmatprep.subr.bf16.mxu0 %v184
    %248 = vmatpush1.bf16.msra.mxu0 %v183
    %249 = vmatprep.subr.bf16.mxu0 %v186
    %250 = vmatpush1.bf16.msra.mxu0 %v185
    %251 = vmatprep.subr.bf16.mxu0 %v188
    %252 = vmatpush1.bf16.msra.mxu0 %v187
    %253 = vmatprep.subr.bf16.mxu0 %v190
    %254 = vmatpush1.bf16.msra.mxu0 %v189
    %255 = vmatprep.subr.bf16.mxu0 %v192
    %256 = vmatpush1.bf16.msra.mxu0 %v191
    %257 = vmatprep.subr.bf16.mxu0 %v194
    %258 = vmatpush1.bf16.msra.mxu0 %v193
    %259 = vmatprep.subr.bf16.mxu0 %v196
    %260 = vmatpush1.bf16.msra.mxu0 %v195
    %261 = vmatprep.subr.bf16.mxu0 %v198
    %262 = vmatpush1.bf16.msra.mxu0 %v197
    %263 = vmatprep.subr.bf16.mxu0 %v200
    %264 = vmatpush1.bf16.msra.mxu0 %v199
    %265 = vmatprep.subr.bf16.mxu0 %v202
    %266 = vmatpush1.bf16.msra.mxu0 %v201
    %267 = vmatprep.subr.bf16.mxu0 %v204
    %268 = vmatpush1.bf16.msra.mxu0 %v203
    %269 = vmatprep.subr.bf16.mxu0 %v206
    %270 = vmatpush1.bf16.msra.mxu0 %v205
    %271 = vmatprep.subr.bf16.mxu0 %v208
    %272 = vmatpush1.bf16.msra.mxu0 %v207
    %273 = vmatprep.subr.bf16.mxu0 %v210
    %274 = vmatpush1.bf16.msra.mxu0 %v209
    %275 = vmatprep.subr.bf16.mxu0 %v212
    %276 = vmatpush1.bf16.msra.mxu0 %v211
    %277 = vmatprep.mubr.bf16.mxu0 %v82
    %278 = vmatmul.mubr.bf16.gmra.mrb[0].mxu0 %v81
    %v279 = vpop.f32.mrb[0].mxu0
    %v280 = vadd.f32 0.0, %v279
    %v281 = vpop.f32.mrb[0].mxu0
    %v282 = vadd.f32 0.0, %v281
    %v283 = vpop.f32.mrb[0].mxu0
    %v284 = vadd.f32 0.0, %v283
    %v285 = vpop.f32.mrb[0].mxu0
    %v286 = vadd.f32 0.0, %v285
    %287 = vdwg.mxu0
    %v288 = vadd.f32 %v37, %v280
    %v289 = vadd.f32 %v38, %v282
    %v290 = vadd.f32 %v39, %v284
    %v291 = vadd.f32 %v40, %v286
    %292 = vst [vmem:[#allocation2] sm:$0xff] %v288
    %293 = vst [vmem:[#allocation2 + $0x8] sm:$0xff] %v289
    %294 = vst [vmem:[#allocation2 + $0x10] sm:$0xff] %v290
    %295 = vst [vmem:[#allocation2 + $0x18] sm:$0xff] %v291
    // Predicated region
    $region30: #{_lambda_.4} parent=1 // pred_check
      %p296 = pneg %p22
    $region31: #{_lambda_.4} parent=1 // pred_check_branch
      %298 = sbr.rel (%p296) target = $region33
    $region32: #{_lambda_.4} parent=1 // pred_region
      %v299 = vld [vmem:[#allocation2] sm:$0xff]
      %v300 = vld [vmem:[#allocation2 + $0x8] sm:$0xff]
      %v301 = vld [vmem:[#allocation2 + $0x10] sm:$0xff]
      %v302 = vld [vmem:[#allocation2 + $0x18] sm:$0xff]
      %v303 = vld [vmem:[%s2] sm:$0x3]
      %v305 = vlaneseq
      %v306 = vshrl.u32 %v305, 7
      %v307 = vsub.s32 0, %v306
      %v308 = vrot.slane %v303, %v307
      %v309 = vlaneseq
      %v310 = vshrl.u32 %v309, 7
      %v311 = vsub.s32 1, %v310
      %v312 = vrot.slane %v303, %v311
      %v315 = vadd.f32 %v299, %v308
      %v316 = vadd.f32 %v300, %v312
      %v317 = vadd.f32 %v301, %v308
      %v318 = vadd.f32 %v302, %v312
      %v319 = vmax.f32 %v315, 0.0
      %v320 = vmax.f32 %v316, 0.0
      %v321 = vmax.f32 %v317, 0.0
      %v322 = vmax.f32 %v318, 0.0
      %v323 = vld [vmem:[#allocation3] sm:$0xff]
      %v324 = vld [vmem:[#allocation3 + $0x8] sm:$0xff]
      %v325 = vpack.c.bf16 %v321, %v319
      %v326 = vpack.c.bf16 %v322, %v320
      %v327 = vld [vmem:[%s3] sm:$0xf]
      %v328 = vld [vmem:[%s3 + $0x4] sm:$0xf]
      %v329 = vld [vmem:[%s3 + $0x8] sm:$0xf]
      %v330 = vld [vmem:[%s3 + $0xc] sm:$0xf]
      %v331 = vld [vmem:[%s3 + $0x10] sm:$0xf]
      %v332 = vld [vmem:[%s3 + $0x14] sm:$0xf]
      %v333 = vld [vmem:[%s3 + $0x18] sm:$0xf]
      %v334 = vld [vmem:[%s3 + $0x1c] sm:$0xf]
      %v335 = vld [vmem:[%s3 + $0x20] sm:$0xf]
      %v336 = vld [vmem:[%s3 + $0x24] sm:$0xf]
      %v337 = vld [vmem:[%s3 + $0x28] sm:$0xf]
      %v338 = vld [vmem:[%s3 + $0x2c] sm:$0xf]
      %v339 = vld [vmem:[%s3 + $0x30] sm:$0xf]
      %v340 = vld [vmem:[%s3 + $0x34] sm:$0xf]
      %v341 = vld [vmem:[%s3 + $0x38] sm:$0xf]
      %v342 = vld [vmem:[%s3 + $0x3c] sm:$0xf]
      %v343 = vld [vmem:[%s3 + $0x40] sm:$0xf]
      %v344 = vld [vmem:[%s3 + $0x44] sm:$0xf]
      %v345 = vld [vmem:[%s3 + $0x48] sm:$0xf]
      %v346 = vld [vmem:[%s3 + $0x4c] sm:$0xf]
      %v347 = vld [vmem:[%s3 + $0x50] sm:$0xf]
      %v348 = vld [vmem:[%s3 + $0x54] sm:$0xf]
      %v349 = vld [vmem:[%s3 + $0x58] sm:$0xf]
      %v350 = vld [vmem:[%s3 + $0x5c] sm:$0xf]
      %v351 = vld [vmem:[%s3 + $0x60] sm:$0xf]
      %v352 = vld [vmem:[%s3 + $0x64] sm:$0xf]
      %v353 = vld [vmem:[%s3 + $0x68] sm:$0xf]
      %v354 = vld [vmem:[%s3 + $0x6c] sm:$0xf]
      %v355 = vld [vmem:[%s3 + $0x70] sm:$0xf]
      %v356 = vld [vmem:[%s3 + $0x74] sm:$0xf]
      %v357 = vld [vmem:[%s3 + $0x78] sm:$0xf]
      %v358 = vld [vmem:[%s3 + $0x7c] sm:$0xf]
      %v391 = vunpack.c.l.b16 %v327
      %v392 = vunpack.c.l.b16 %v328
      %v393 = vunpack.c.l.b16 %v329
      %v394 = vunpack.c.l.b16 %v330
      %v395 = vunpack.c.l.b16 %v331
      %v396 = vunpack.c.l.b16 %v332
      %v397 = vunpack.c.l.b16 %v333
      %v398 = vunpack.c.l.b16 %v334
      %v399 = vunpack.c.l.b16 %v335
      %v400 = vunpack.c.l.b16 %v336
      %v401 = vunpack.c.l.b16 %v337
      %v402 = vunpack.c.l.b16 %v338
      %v403 = vunpack.c.l.b16 %v339
      %v404 = vunpack.c.l.b16 %v340
      %v405 = vunpack.c.l.b16 %v341
      %v406 = vunpack.c.l.b16 %v342
      %v407 = vunpack.c.l.b16 %v343
      %v408 = vunpack.c.l.b16 %v344
      %v409 = vunpack.c.l.b16 %v345
      %v410 = vunpack.c.l.b16 %v346
      %v411 = vunpack.c.l.b16 %v347
      %v412 = vunpack.c.l.b16 %v348
      %v413 = vunpack.c.l.b16 %v349
      %v414 = vunpack.c.l.b16 %v350
      %v415 = vunpack.c.l.b16 %v351
      %v416 = vunpack.c.l.b16 %v352
      %v417 = vunpack.c.l.b16 %v353
      %v418 = vunpack.c.l.b16 %v354
      %v419 = vunpack.c.l.b16 %v355
      %v420 = vunpack.c.l.b16 %v356
      %v421 = vunpack.c.l.b16 %v357
      %v422 = vunpack.c.l.b16 %v358
      %v423 = vpack.c.b16 %v392, %v391
      %v424 = vpack.c.b16 %v394, %v393
      %v425 = vpack.c.b16 %v396, %v395
      %v426 = vpack.c.b16 %v398, %v397
      %v427 = vpack.c.b16 %v400, %v399
      %v428 = vpack.c.b16 %v402, %v401
      %v429 = vpack.c.b16 %v404, %v403
      %v430 = vpack.c.b16 %v406, %v405
      %v431 = vpack.c.b16 %v408, %v407
      %v432 = vpack.c.b16 %v410, %v409
      %v433 = vpack.c.b16 %v412, %v411
      %v434 = vpack.c.b16 %v414, %v413
      %v435 = vpack.c.b16 %v416, %v415
      %v436 = vpack.c.b16 %v418, %v417
      %v437 = vpack.c.b16 %v420, %v419
      %v438 = vpack.c.b16 %v422, %v421
      %455 = vmatprep.subr.bf16.mxu0 0
      %456 = vmatpush1.bf16.msra.mxu0 %v423
      %457 = vmatprep.subr.bf16.mxu0 0
      %458 = vmatpush1.bf16.msra.mxu0 %v424
      %459 = vmatprep.subr.bf16.mxu0 0
      %460 = vmatpush1.bf16.msra.mxu0 %v425
      %461 = vmatprep.subr.bf16.mxu0 0
      %462 = vmatpush1.bf16.msra.mxu0 %v426
      %463 = vmatprep.subr.bf16.mxu0 0
      %464 = vmatpush1.bf16.msra.mxu0 %v427
      %465 = vmatprep.subr.bf16.mxu0 0
      %466 = vmatpush1.bf16.msra.mxu0 %v428
      %467 = vmatprep.subr.bf16.mxu0 0
      %468 = vmatpush1.bf16.msra.mxu0 %v429
      %469 = vmatprep.subr.bf16.mxu0 0
      %470 = vmatpush1.bf16.msra.mxu0 %v430
      %471 = vmatprep.subr.bf16.mxu0 0
      %472 = vmatpush1.bf16.msra.mxu0 %v431
      %473 = vmatprep.subr.bf16.mxu0 0
      %474 = vmatpush1.bf16.msra.mxu0 %v432
      %475 = vmatprep.subr.bf16.mxu0 0
      %476 = vmatpush1.bf16.msra.mxu0 %v433
      %477 = vmatprep.subr.bf16.mxu0 0
      %478 = vmatpush1.bf16.msra.mxu0 %v434
      %479 = vmatprep.subr.bf16.mxu0 0
      %480 = vmatpush1.bf16.msra.mxu0 %v435
      %481 = vmatprep.subr.bf16.mxu0 0
      %482 = vmatpush1.bf16.msra.mxu0 %v436
      %483 = vmatprep.subr.bf16.mxu0 0
      %484 = vmatpush1.bf16.msra.mxu0 %v437
      %485 = vmatprep.subr.bf16.mxu0 0
      %486 = vmatpush1.bf16.msra.mxu0 %v438
      %487 = vmatprep.mubr.bf16.mxu0 %v326
      %488 = vmatmul.mubr.bf16.gmra.mrb[0].mxu0 %v325
      %v489 = vpop.f32.mrb[0].mxu0
      %v490 = vadd.f32 0.0, %v489
      %v491 = vpop.f32.mrb[0].mxu0
      %v492 = vpop.f32.mrb[0].mxu0
      %v493 = vadd.f32 0.0, %v492
      %v494 = vpop.f32.mrb[0].mxu0
      %495 = vdwg.mxu0
      %v496 = vadd.f32 %v323, %v490
      %v497 = vadd.f32 %v324, %v493
      %498 = vst [vmem:[#allocation3] sm:$0xff] %v496
      %499 = vst [vmem:[#allocation3 + $0x8] sm:$0xff] %v497
    $region33: #{_lambda_.4} parent=1 // pred_fallthru
      _
    // Predicated region
    $region34: #{_lambda_.4} parent=1 // pred_check
      _
    $region35: #{_lambda_.4} parent=1 // pred_check_branch
      %501 = sbr.rel (%p31) target = $region37
    $region36: #{_lambda_.4} parent=1 // pred_region
      %v502 = vld [vmem:[#allocation3] sm:$0xff]
      %v503 = vld [vmem:[#allocation3 + $0x8] sm:$0xff]
      %v504 = vld [vmem:[%s4] sm:$0x1]
      %v506 = vlaneseq
      %v507 = vshrl.u32 %v506, 7
      %v508 = vsub.s32 0, %v507
      %v509 = vrot.slane %v504, %v508
      %v511 = vadd.f32 %v502, %v509
      %v512 = vadd.f32 %v503, %v509
      %513 = vst [vmem:[#allocation4] sm:$0xff] %v511
      %514 = vst [vmem:[#allocation4 + $0x8] sm:$0xff] %v512
    $region37: #{_lambda_.4} parent=1 // pred_fallthru
      _
    // Predicated region
    $region38: #{_lambda_.4} parent=1 // pred_check
      _
    $region39: #{_lambda_.4} parent=1 // pred_check_branch
      %516 = sbr.rel (0) target = $region41
    $region40: #{_lambda_.4} parent=1 // pred_region
      %s518 = ssub.s32 256, 256
      %519 = vsyncadd [#allocation5], %s518
      %s520 = sshll.u32 [#allocation4], 4
      %s521 = int_to_ptr.vmem [resolvable:$true] %s520
      %526 = dma.vmem_to_hbm [thread:$0]  %s521, 256, %s5, [#allocation5], 128, 128, 8
    $region41: #{_lambda_.4} parent=1 // pred_fallthru
      _
    // Predicated region
    $region42: #{_lambda_.4} parent=1 // pred_check
      _
    $region43: #{_lambda_.4} parent=1 // pred_check_branch
      %528 = sbr.rel (0) target = $region45
    $region44: #{_lambda_.4} parent=1 // pred_region
      %529 = dma.done [#allocation5], 256
    $region45: #{_lambda_.4} parent=1 // pred_fallthru
      _
    %530 = vsyncpa [#allocation5], 1

// kernel: _lambda_.5
$region0: #{_lambda_.5}
  #allocation0 [shape = 'u32[]', space=smem, size = 0x4, offset = 0x4, fixed_abs, tag = 'smem constant byte address 0x4 - core index']
  #allocation1 [shape = 'u32[144,128]{1,0:T(1,128)}', space=vmem, size = 0x12000, scoped, tag = 'internal scratch']
  #allocation2 [shape = 'f32[16,128]{1,0:T(8,128)}', space=vmem, size = 0x2000, scoped, tag = 'scratch operand']
  #allocation3 [shape = 'f32[16,128]{1,0:T(8,128)}', space=vmem, size = 0x2000, scoped, tag = 'scratch operand']
  %s0 = inlined_call_operand.vmem [shape: bf16[16,512], index: 0, kind: input, shape index: {}]
  %s1 = inlined_call_operand.vmem [shape: bf16[512,128], index: 1, kind: input, shape index: {}]
  %s2 = inlined_call_operand.vmem [shape: f32[1,128], index: 2, kind: input, shape index: {}]
  %s3 = inlined_call_operand.vmem [shape: bf16[128,128], index: 3, kind: input, shape index: {}]
  %s4 = inlined_call_operand.vmem [shape: f32[1,128], index: 4, kind: input, shape index: {}]
  %s5 = inlined_call_operand.vmem [shape: f32[16,128], index: 5, kind: output, shape index: {}]
  %s6 = sld [smem:[#allocation0]]
  $region46: #{_lambda_.5} parent=0
    _
  %s8 = ssub.s32 1, %s6
  %s9 = scalar_select 0, %s8, %s6
  // Predicated region
  $region2: #{_lambda_.5} parent=0 // pred_check
    _
  $region3: #{_lambda_.5} parent=0 // pred_check_branch
    %11 = sbr.rel (0) target = $region5
  $region4: #{_lambda_.5} parent=0 // pred_region
    _
  $region5: #{_lambda_.5} parent=0 // pred_fallthru
    _
  // Predicated region
  $region6: #{_lambda_.5} parent=0 // pred_check
    _
  $region7: #{_lambda_.5} parent=0 // pred_check_branch
    %13 = sbr.rel (0) target = $region9
  $region8: #{_lambda_.5} parent=0 // pred_region
    _
  $region9: #{_lambda_.5} parent=0 // pred_fallthru
    _
  // Predicated region
  $region10: #{_lambda_.5} parent=0 // pred_check
    _
  $region11: #{_lambda_.5} parent=0 // pred_check_branch
    %15 = sbr.rel (0) target = $region13
  $region12: #{_lambda_.5} parent=0 // pred_region
    _
  $region13: #{_lambda_.5} parent=0 // pred_fallthru
    _
  // Predicated region
  $region14: #{_lambda_.5} parent=0 // pred_check
    _
  $region15: #{_lambda_.5} parent=0 // pred_check_branch
    %17 = sbr.rel (0) target = $region17
  $region16: #{_lambda_.5} parent=0 // pred_region
    _
  $region17: #{_lambda_.5} parent=0 // pred_fallthru
    _
  // Predicated region
  $region18: #{_lambda_.5} parent=0 // pred_check
    _
  $region19: #{_lambda_.5} parent=0 // pred_check_branch
    %19 = sbr.rel (0) target = $region21
  $region20: #{_lambda_.5} parent=0 // pred_region
    _
  $region21: #{_lambda_.5} parent=0 // pred_fallthru
    _
  %p21 = scmp.eq.s32.totalorder 0, 0
  %p22 = scmp.eq.s32.totalorder 0, 0
  // Predicated region
  $region22: #{_lambda_.5} parent=0 // pred_check
    %p23 = pneg %p21
  $region23: #{_lambda_.5} parent=0 // pred_check_branch
    %25 = sbr.rel (%p23) target = $region25
  $region24: #{_lambda_.5} parent=0 // pred_region
    %26 = vst [vmem:[#allocation2] sm:$0xff] 0.0
    %27 = vst [vmem:[#allocation2 + $0x8] sm:$0xff] 0.0
  $region25: #{_lambda_.5} parent=0 // pred_fallthru
    _
  %p28 = pnand %p22, %p21
  %p29 = pneg %p28
  // Predicated region
  $region26: #{_lambda_.5} parent=0 // pred_check
    _
  $region27: #{_lambda_.5} parent=0 // pred_check_branch
    %31 = sbr.rel (%p28) target = $region29
  $region28: #{_lambda_.5} parent=0 // pred_region
    %32 = vst [vmem:[#allocation3] sm:$0xff] 0.0
    %33 = vst [vmem:[#allocation3 + $0x8] sm:$0xff] 0.0
  $region29: #{_lambda_.5} parent=0 // pred_fallthru
    _
  %v34 = vld [vmem:[#allocation2] sm:$0xff]
  %v35 = vld [vmem:[#allocation2 + $0x8] sm:$0xff]
  %v36 = vld [vmem:[%s0] sm:$0xff]
  %v37 = vld [vmem:[%s0 + $0x8] sm:$0xff]
  %v38 = vld [vmem:[%s0 + $0x10] sm:$0xff]
  %v39 = vld [vmem:[%s0 + $0x18] sm:$0xff]
  %v40 = vld [vmem:[%s1] sm:$0xf]
  %v41 = vld [vmem:[%s1 + $0x4] sm:$0xf]
  %v42 = vld [vmem:[%s1 + $0x8] sm:$0xf]
  %v43 = vld [vmem:[%s1 + $0xc] sm:$0xf]
  %v44 = vld [vmem:[%s1 + $0x10] sm:$0xf]
  %v45 = vld [vmem:[%s1 + $0x14] sm:$0xf]
  %v46 = vld [vmem:[%s1 + $0x18] sm:$0xf]
  %v47 = vld [vmem:[%s1 + $0x1c] sm:$0xf]
  %v48 = vld [vmem:[%s1 + $0x20] sm:$0xf]
  %v49 = vld [vmem:[%s1 + $0x24] sm:$0xf]
  %v50 = vld [vmem:[%s1 + $0x28] sm:$0xf]
  %v51 = vld [vmem:[%s1 + $0x2c] sm:$0xf]
  %v52 = vld [vmem:[%s1 + $0x30] sm:$0xf]
  %v53 = vld [vmem:[%s1 + $0x34] sm:$0xf]
  %v54 = vld [vmem:[%s1 + $0x38] sm:$0xf]
  %v55 = vld [vmem:[%s1 + $0x3c] sm:$0xf]
  %v56 = vld [vmem:[%s1 + $0x40] sm:$0xf]
  %v57 = vld [vmem:[%s1 + $0x44] sm:$0xf]
  %v58 = vld [vmem:[%s1 + $0x48] sm:$0xf]
  %v59 = vld [vmem:[%s1 + $0x4c] sm:$0xf]
  %v60 = vld [vmem:[%s1 + $0x50] sm:$0xf]
  %v61 = vld [vmem:[%s1 + $0x54] sm:$0xf]
  %v62 = vld [vmem:[%s1 + $0x58] sm:$0xf]
  %v63 = vld [vmem:[%s1 + $0x5c] sm:$0xf]
  %v64 = vld [vmem:[%s1 + $0x60] sm:$0xf]
  %v65 = vld [vmem:[%s1 + $0x64] sm:$0xf]
  %v66 = vld [vmem:[%s1 + $0x68] sm:$0xf]
  %v67 = vld [vmem:[%s1 + $0x6c] sm:$0xf]
  %v68 = vld [vmem:[%s1 + $0x70] sm:$0xf]
  %v69 = vld [vmem:[%s1 + $0x74] sm:$0xf]
  %v70 = vld [vmem:[%s1 + $0x78] sm:$0xf]
  %v71 = vld [vmem:[%s1 + $0x7c] sm:$0xf]
  %v72 = vld [vmem:[%s1 + $0x80] sm:$0xf]
  %v73 = vld [vmem:[%s1 + $0x84] sm:$0xf]
  %v74 = vld [vmem:[%s1 + $0x88] sm:$0xf]
  %v75 = vld [vmem:[%s1 + $0x8c] sm:$0xf]
  %v76 = vld [vmem:[%s1 + $0x90] sm:$0xf]
  %v77 = vld [vmem:[%s1 + $0x94] sm:$0xf]
  %v78 = vld [vmem:[%s1 + $0x98] sm:$0xf]
  %v79 = vld [vmem:[%s1 + $0x9c] sm:$0xf]
  %v80 = vld [vmem:[%s1 + $0xa0] sm:$0xf]
  %v81 = vld [vmem:[%s1 + $0xa4] sm:$0xf]
  %v82 = vld [vmem:[%s1 + $0xa8] sm:$0xf]
  %v83 = vld [vmem:[%s1 + $0xac] sm:$0xf]
  %v84 = vld [vmem:[%s1 + $0xb0] sm:$0xf]
  %v85 = vld [vmem:[%s1 + $0xb4] sm:$0xf]
  %v86 = vld [vmem:[%s1 + $0xb8] sm:$0xf]
  %v87 = vld [vmem:[%s1 + $0xbc] sm:$0xf]
  %v88 = vld [vmem:[%s1 + $0xc0] sm:$0xf]
  %v89 = vld [vmem:[%s1 + $0xc4] sm:$0xf]
  %v90 = vld [vmem:[%s1 + $0xc8] sm:$0xf]
  %v91 = vld [vmem:[%s1 + $0xcc] sm:$0xf]
  %v92 = vld [vmem:[%s1 + $0xd0] sm:$0xf]
  %v93 = vld [vmem:[%s1 + $0xd4] sm:$0xf]
  %v94 = vld [vmem:[%s1 + $0xd8] sm:$0xf]
  %v95 = vld [vmem:[%s1 + $0xdc] sm:$0xf]
  %v96 = vld [vmem:[%s1 + $0xe0] sm:$0xf]
  %v97 = vld [vmem:[%s1 + $0xe4] sm:$0xf]
  %v98 = vld [vmem:[%s1 + $0xe8] sm:$0xf]
  %v99 = vld [vmem:[%s1 + $0xec] sm:$0xf]
  %v100 = vld [vmem:[%s1 + $0xf0] sm:$0xf]
  %v101 = vld [vmem:[%s1 + $0xf4] sm:$0xf]
  %v102 = vld [vmem:[%s1 + $0xf8] sm:$0xf]
  %v103 = vld [vmem:[%s1 + $0xfc] sm:$0xf]
  %v108 = vunpack.c.l.b16 %v36
  %v109 = vunpack.c.h.b16 %v36
  %v110 = vunpack.c.l.b16 %v37
  %v111 = vunpack.c.h.b16 %v37
  %v112 = vunpack.c.l.b16 %v38
  %v113 = vunpack.c.h.b16 %v38
  %v114 = vunpack.c.l.b16 %v39
  %v115 = vunpack.c.h.b16 %v39
  %v116 = vpack.c.b16 %v112, %v108
  %v117 = vpack.c.b16 %v113, %v109
  %v118 = vpack.c.b16 %v114, %v110
  %v119 = vpack.c.b16 %v115, %v111
  %v188 = vunpack.c.l.b16 %v40
  %v189 = vunpack.c.l.b16 %v41
  %v190 = vunpack.c.l.b16 %v42
  %v191 = vunpack.c.l.b16 %v43
  %v192 = vunpack.c.l.b16 %v44
  %v193 = vunpack.c.l.b16 %v45
  %v194 = vunpack.c.l.b16 %v46
  %v195 = vunpack.c.l.b16 %v47
  %v196 = vunpack.c.l.b16 %v48
  %v197 = vunpack.c.l.b16 %v49
  %v198 = vunpack.c.l.b16 %v50
  %v199 = vunpack.c.l.b16 %v51
  %v200 = vunpack.c.l.b16 %v52
  %v201 = vunpack.c.l.b16 %v53
  %v202 = vunpack.c.l.b16 %v54
  %v203 = vunpack.c.l.b16 %v55
  %v204 = vunpack.c.l.b16 %v56
  %v205 = vunpack.c.l.b16 %v57
  %v206 = vunpack.c.l.b16 %v58
  %v207 = vunpack.c.l.b16 %v59
  %v208 = vunpack.c.l.b16 %v60
  %v209 = vunpack.c.l.b16 %v61
  %v210 = vunpack.c.l.b16 %v62
  %v211 = vunpack.c.l.b16 %v63
  %v212 = vunpack.c.l.b16 %v64
  %v213 = vunpack.c.l.b16 %v65
  %v214 = vunpack.c.l.b16 %v66
  %v215 = vunpack.c.l.b16 %v67
  %v216 = vunpack.c.l.b16 %v68
  %v217 = vunpack.c.l.b16 %v69
  %v218 = vunpack.c.l.b16 %v70
  %v219 = vunpack.c.l.b16 %v71
  %v220 = vunpack.c.l.b16 %v72
  %v221 = vunpack.c.l.b16 %v73
  %v222 = vunpack.c.l.b16 %v74
  %v223 = vunpack.c.l.b16 %v75
  %v224 = vunpack.c.l.b16 %v76
  %v225 = vunpack.c.l.b16 %v77
  %v226 = vunpack.c.l.b16 %v78
  %v227 = vunpack.c.l.b16 %v79
  %v228 = vunpack.c.l.b16 %v80
  %v229 = vunpack.c.l.b16 %v81
  %v230 = vunpack.c.l.b16 %v82
  %v231 = vunpack.c.l.b16 %v83
  %v232 = vunpack.c.l.b16 %v84
  %v233 = vunpack.c.l.b16 %v85
  %v234 = vunpack.c.l.b16 %v86
  %v235 = vunpack.c.l.b16 %v87
  %v236 = vunpack.c.l.b16 %v88
  %v237 = vunpack.c.l.b16 %v89
  %v238 = vunpack.c.l.b16 %v90
  %v239 = vunpack.c.l.b16 %v91
  %v240 = vunpack.c.l.b16 %v92
  %v241 = vunpack.c.l.b16 %v93
  %v242 = vunpack.c.l.b16 %v94
  %v243 = vunpack.c.l.b16 %v95
  %v244 = vunpack.c.l.b16 %v96
  %v245 = vunpack.c.l.b16 %v97
  %v246 = vunpack.c.l.b16 %v98
  %v247 = vunpack.c.l.b16 %v99
  %v248 = vunpack.c.l.b16 %v100
  %v249 = vunpack.c.l.b16 %v101
  %v250 = vunpack.c.l.b16 %v102
  %v251 = vunpack.c.l.b16 %v103
  %v252 = vpack.c.b16 %v189, %v188
  %v253 = vpack.c.b16 %v191, %v190
  %v254 = vpack.c.b16 %v193, %v192
  %v255 = vpack.c.b16 %v195, %v194
  %v256 = vpack.c.b16 %v197, %v196
  %v257 = vpack.c.b16 %v199, %v198
  %v258 = vpack.c.b16 %v201, %v200
  %v259 = vpack.c.b16 %v203, %v202
  %v260 = vpack.c.b16 %v205, %v204
  %v261 = vpack.c.b16 %v207, %v206
  %v262 = vpack.c.b16 %v209, %v208
  %v263 = vpack.c.b16 %v211, %v210
  %v264 = vpack.c.b16 %v213, %v212
  %v265 = vpack.c.b16 %v215, %v214
  %v266 = vpack.c.b16 %v217, %v216
  %v267 = vpack.c.b16 %v219, %v218
  %v268 = vpack.c.b16 %v221, %v220
  %v269 = vpack.c.b16 %v223, %v222
  %v270 = vpack.c.b16 %v225, %v224
  %v271 = vpack.c.b16 %v227, %v226
  %v272 = vpack.c.b16 %v229, %v228
  %v273 = vpack.c.b16 %v231, %v230
  %v274 = vpack.c.b16 %v233, %v232
  %v275 = vpack.c.b16 %v235, %v234
  %v276 = vpack.c.b16 %v237, %v236
  %v277 = vpack.c.b16 %v239, %v238
  %v278 = vpack.c.b16 %v241, %v240
  %v279 = vpack.c.b16 %v243, %v242
  %v280 = vpack.c.b16 %v245, %v244
  %v281 = vpack.c.b16 %v247, %v246
  %v282 = vpack.c.b16 %v249, %v248
  %v283 = vpack.c.b16 %v251, %v250
  %316 = vmatprep.subr.bf16.mxu0 0
  %317 = vmatpush1.bf16.msra.mxu0 %v252
  %318 = vmatprep.subr.bf16.mxu0 0
  %319 = vmatpush1.bf16.msra.mxu0 %v253
  %320 = vmatprep.subr.bf16.mxu0 0
  %321 = vmatpush1.bf16.msra.mxu0 %v254
  %322 = vmatprep.subr.bf16.mxu0 0
  %323 = vmatpush1.bf16.msra.mxu0 %v255
  %324 = vmatprep.subr.bf16.mxu0 0
  %325 = vmatpush1.bf16.msra.mxu0 %v256
  %326 = vmatprep.subr.bf16.mxu0 0
  %327 = vmatpush1.bf16.msra.mxu0 %v257
  %328 = vmatprep.subr.bf16.mxu0 0
  %329 = vmatpush1.bf16.msra.mxu0 %v258
  %330 = vmatprep.subr.bf16.mxu0 0
  %331 = vmatpush1.bf16.msra.mxu0 %v259
  %332 = vmatprep.subr.bf16.mxu0 0
  %333 = vmatpush1.bf16.msra.mxu0 %v260
  %334 = vmatprep.subr.bf16.mxu0 0
  %335 = vmatpush1.bf16.msra.mxu0 %v261
  %336 = vmatprep.subr.bf16.mxu0 0
  %337 = vmatpush1.bf16.msra.mxu0 %v262
  %338 = vmatprep.subr.bf16.mxu0 0
  %339 = vmatpush1.bf16.msra.mxu0 %v263
  %340 = vmatprep.subr.bf16.mxu0 0
  %341 = vmatpush1.bf16.msra.mxu0 %v264
  %342 = vmatprep.subr.bf16.mxu0 0
  %343 = vmatpush1.bf16.msra.mxu0 %v265
  %344 = vmatprep.subr.bf16.mxu0 0
  %345 = vmatpush1.bf16.msra.mxu0 %v266
  %346 = vmatprep.subr.bf16.mxu0 0
  %347 = vmatpush1.bf16.msra.mxu0 %v267
  %348 = vmatprep.mubr.bf16.mxu0 %v117
  %349 = vmatmul.mubr.bf16.gmra.mrb[0].mxu0 %v116
  %v350 = vpop.f32.mrb[0].mxu0
  %v351 = vadd.f32 0.0, %v350
  %v352 = vpop.f32.mrb[0].mxu0
  %v353 = vpop.f32.mrb[0].mxu0
  %v354 = vadd.f32 0.0, %v353
  %v355 = vpop.f32.mrb[0].mxu0
  %356 = vdwg.mxu0
  %357 = vmatprep.subr.bf16.mxu0 0
  %358 = vmatpush1.bf16.msra.mxu0 %v268
  %359 = vmatprep.subr.bf16.mxu0 0
  %360 = vmatpush1.bf16.msra.mxu0 %v269
  %361 = vmatprep.subr.bf16.mxu0 0
  %362 = vmatpush1.bf16.msra.mxu0 %v270
  %363 = vmatprep.subr.bf16.mxu0 0
  %364 = vmatpush1.bf16.msra.mxu0 %v271
  %365 = vmatprep.subr.bf16.mxu0 0
  %366 = vmatpush1.bf16.msra.mxu0 %v272
  %367 = vmatprep.subr.bf16.mxu0 0
  %368 = vmatpush1.bf16.msra.mxu0 %v273
  %369 = vmatprep.subr.bf16.mxu0 0
  %370 = vmatpush1.bf16.msra.mxu0 %v274
  %371 = vmatprep.subr.bf16.mxu0 0
  %372 = vmatpush1.bf16.msra.mxu0 %v275
  %373 = vmatprep.subr.bf16.mxu0 0
  %374 = vmatpush1.bf16.msra.mxu0 %v276
  %375 = vmatprep.subr.bf16.mxu0 0
  %376 = vmatpush1.bf16.msra.mxu0 %v277
  %377 = vmatprep.subr.bf16.mxu0 0
  %378 = vmatpush1.bf16.msra.mxu0 %v278
  %379 = vmatprep.subr.bf16.mxu0 0
  %380 = vmatpush1.bf16.msra.mxu0 %v279
  %381 = vmatprep.subr.bf16.mxu0 0
  %382 = vmatpush1.bf16.msra.mxu0 %v280
  %383 = vmatprep.subr.bf16.mxu0 0
  %384 = vmatpush1.bf16.msra.mxu0 %v281
  %385 = vmatprep.subr.bf16.mxu0 0
  %386 = vmatpush1.bf16.msra.mxu0 %v282
  %387 = vmatprep.subr.bf16.mxu0 0
  %388 = vmatpush1.bf16.msra.mxu0 %v283
  %389 = vmatprep.mubr.bf16.mxu0 %v119
  %390 = vmatmul.mubr.bf16.gmra.mrb[0].mxu0 %v118
  %v391 = vpop.f32.mrb[0].mxu0
  %v392 = vadd.f32 %v351, %v391
  %v393 = vpop.f32.mrb[0].mxu0
  %v394 = vpop.f32.mrb[0].mxu0
  %v395 = vadd.f32 %v354, %v394
  %v396 = vpop.f32.mrb[0].mxu0
  %397 = vdwg.mxu0
  %v398 = vadd.f32 %v34, %v392
  %v399 = vadd.f32 %v35, %v395
  %400 = vst [vmem:[#allocation2] sm:$0xff] %v398
  %401 = vst [vmem:[#allocation2 + $0x8] sm:$0xff] %v399
  // Predicated region
  $region30: #{_lambda_.5} parent=0 // pred_check
    %p402 = pneg %p21
  $region31: #{_lambda_.5} parent=0 // pred_check_branch
    %404 = sbr.rel (%p402) target = $region33
  $region32: #{_lambda_.5} parent=0 // pred_region
    %v405 = vld [vmem:[#allocation2] sm:$0xff]
    %v406 = vld [vmem:[#allocation2 + $0x8] sm:$0xff]
    %v407 = vld [vmem:[%s2] sm:$0x1]
    %v409 = vlaneseq
    %v410 = vshrl.u32 %v409, 7
    %v411 = vsub.s32 0, %v410
    %v412 = vrot.slane %v407, %v411
    %v414 = vadd.f32 %v405, %v412
    %v415 = vadd.f32 %v406, %v412
    %v416 = vmax.f32 %v414, 0.0
    %v417 = vmax.f32 %v415, 0.0
    %v418 = vld [vmem:[#allocation3] sm:$0xff]
    %v419 = vld [vmem:[#allocation3 + $0x8] sm:$0xff]
    %v420 = vpack.c.bf16 %v417, %v416
    %v421 = vld [vmem:[%s3] sm:$0xf]
    %v422 = vld [vmem:[%s3 + $0x4] sm:$0xf]
    %v423 = vld [vmem:[%s3 + $0x8] sm:$0xf]
    %v424 = vld [vmem:[%s3 + $0xc] sm:$0xf]
    %v425 = vld [vmem:[%s3 + $0x10] sm:$0xf]
    %v426 = vld [vmem:[%s3 + $0x14] sm:$0xf]
    %v427 = vld [vmem:[%s3 + $0x18] sm:$0xf]
    %v428 = vld [vmem:[%s3 + $0x1c] sm:$0xf]
    %v429 = vld [vmem:[%s3 + $0x20] sm:$0xf]
    %v430 = vld [vmem:[%s3 + $0x24] sm:$0xf]
    %v431 = vld [vmem:[%s3 + $0x28] sm:$0xf]
    %v432 = vld [vmem:[%s3 + $0x2c] sm:$0xf]
    %v433 = vld [vmem:[%s3 + $0x30] sm:$0xf]
    %v434 = vld [vmem:[%s3 + $0x34] sm:$0xf]
    %v435 = vld [vmem:[%s3 + $0x38] sm:$0xf]
    %v436 = vld [vmem:[%s3 + $0x3c] sm:$0xf]
    %v453 = vunpack.c.l.b16 %v421
    %v454 = vunpack.c.l.b16 %v422
    %v455 = vunpack.c.l.b16 %v423
    %v456 = vunpack.c.l.b16 %v424
    %v457 = vunpack.c.l.b16 %v425
    %v458 = vunpack.c.l.b16 %v426
    %v459 = vunpack.c.l.b16 %v427
    %v460 = vunpack.c.l.b16 %v428
    %v461 = vunpack.c.l.b16 %v429
    %v462 = vunpack.c.l.b16 %v430
    %v463 = vunpack.c.l.b16 %v431
    %v464 = vunpack.c.l.b16 %v432
    %v465 = vunpack.c.l.b16 %v433
    %v466 = vunpack.c.l.b16 %v434
    %v467 = vunpack.c.l.b16 %v435
    %v468 = vunpack.c.l.b16 %v436
    %v469 = vpack.c.b16 %v454, %v453
    %v470 = vpack.c.b16 %v456, %v455
    %v471 = vpack.c.b16 %v458, %v457
    %v472 = vpack.c.b16 %v460, %v459
    %v473 = vpack.c.b16 %v462, %v461
    %v474 = vpack.c.b16 %v464, %v463
    %v475 = vpack.c.b16 %v466, %v465
    %v476 = vpack.c.b16 %v468, %v467
    %485 = vmatprep.subr.bf16.mxu0 0
    %486 = vmatpush1.bf16.msra.mxu0 %v469
    %487 = vmatprep.subr.bf16.mxu0 0
    %488 = vmatpush1.bf16.msra.mxu0 %v470
    %489 = vmatprep.subr.bf16.mxu0 0
    %490 = vmatpush1.bf16.msra.mxu0 %v471
    %491 = vmatprep.subr.bf16.mxu0 0
    %492 = vmatpush1.bf16.msra.mxu0 %v472
    %493 = vmatprep.subr.bf16.mxu0 0
    %494 = vmatpush1.bf16.msra.mxu0 %v473
    %495 = vmatprep.subr.bf16.mxu0 0
    %496 = vmatpush1.bf16.msra.mxu0 %v474
    %497 = vmatprep.subr.bf16.mxu0 0
    %498 = vmatpush1.bf16.msra.mxu0 %v475
    %499 = vmatprep.subr.bf16.mxu0 0
    %500 = vmatpush1.bf16.msra.mxu0 %v476
    %501 = vmatprep.subr.bf16.mxu0 0
    %502 = vmatpush1.bf16.msra.mxu0 0
    %503 = vmatprep.subr.bf16.mxu0 0
    %504 = vmatpush1.bf16.msra.mxu0 0
    %505 = vmatprep.subr.bf16.mxu0 0
    %506 = vmatpush1.bf16.msra.mxu0 0
    %507 = vmatprep.subr.bf16.mxu0 0
    %508 = vmatpush1.bf16.msra.mxu0 0
    %509 = vmatprep.subr.bf16.mxu0 0
    %510 = vmatpush1.bf16.msra.mxu0 0
    %511 = vmatprep.subr.bf16.mxu0 0
    %512 = vmatpush1.bf16.msra.mxu0 0
    %513 = vmatprep.subr.bf16.mxu0 0
    %514 = vmatpush1.bf16.msra.mxu0 0
    %515 = vmatprep.subr.bf16.mxu0 0
    %516 = vmatpush1.bf16.msra.mxu0 0
    %517 = vmatprep.mubr.bf16.mxu0 0
    %518 = vmatmul.mubr.bf16.gmra.mrb[0].mxu0 %v420
    %v519 = vpop.f32.mrb[0].mxu0
    %v520 = vadd.f32 0.0, %v519
    %v521 = vpop.f32.mrb[0].mxu0
    %v522 = vpop.f32.mrb[0].mxu0
    %v523 = vadd.f32 0.0, %v522
    %v524 = vpop.f32.mrb[0].mxu0
    %525 = vdwg.mxu0
    %v526 = vadd.f32 %v418, %v520
    %v527 = vadd.f32 %v419, %v523
    %528 = vst [vmem:[#allocation3] sm:$0xff] %v526
    %529 = vst [vmem:[#allocation3 + $0x8] sm:$0xff] %v527
  $region33: #{_lambda_.5} parent=0 // pred_fallthru
    _
  // Predicated region
  $region34: #{_lambda_.5} parent=0 // pred_check
    _
  $region35: #{_lambda_.5} parent=0 // pred_check_branch
    %531 = sbr.rel (%p28) target = $region37
  $region36: #{_lambda_.5} parent=0 // pred_region
    %v532 = vld [vmem:[#allocation3] sm:$0xff]
    %v533 = vld [vmem:[#allocation3 + $0x8] sm:$0xff]
    %v534 = vld [vmem:[%s4] sm:$0x1]
    %v536 = vlaneseq
    %v537 = vshrl.u32 %v536, 7
    %v538 = vsub.s32 0, %v537
    %v539 = vrot.slane %v534, %v538
    %v541 = vadd.f32 %v532, %v539
    %v542 = vadd.f32 %v533, %v539
    %543 = vst [vmem:[%s5] sm:$0xff] %v541
    %544 = vst [vmem:[%s5 + $0x8] sm:$0xff] %v542
  $region37: #{_lambda_.5} parent=0 // pred_fallthru
    _
  // Predicated region
  $region38: #{_lambda_.5} parent=0 // pred_check
    _
  $region39: #{_lambda_.5} parent=0 // pred_check_branch
    %546 = sbr.rel (0) target = $region41
  $region40: #{_lambda_.5} parent=0 // pred_region
    _
  $region41: #{_lambda_.5} parent=0 // pred_fallthru
    _
  // Predicated region
  $region42: #{_lambda_.5} parent=0 // pred_check
    _
  $region43: #{_lambda_.5} parent=0 // pred_check_branch
    %548 = sbr.rel (0) target = $region45
  $region44: #{_lambda_.5} parent=0 // pred_region
    _
  $region45: #{_lambda_.5} parent=0 // pred_fallthru
    _

</llo_original>
